<compile_context>
chip_gen: v6e
topology: v6e:2x2x1
jax: 0.10.0
libtpu: 0.0.40
codegen_flags: <defaults>
</compile_context>

<pallas_src>
import functools

import jax
import jax.numpy as jnp
from jax import lax
from jax.experimental import pallas as pl
from jax.experimental.pallas import tpu as pltpu


HP = 128        # padded hidden width: one full 128-lane block per gate
CP = 128        # padded classifier width: lane-dense output store
SUBLANES = 8    # f32 sublane count


def lstm_classifier_kernel(gin_ref, whh_ref, wfc_ref, bfc_ref, out_ref):
    """gin_ref : (T, Bp, 4*HP) gate pre-activations (x@Wih + b_ih + b_hh), time-major.
       whh_ref : (HP, 4*HP)    recurrent weights, each gate in its own 128-lane block.
       wfc_ref : (HP, CP)      classifier weights (rows >= H and cols >= C zero-padded).
       bfc_ref : (1, CP)
       out_ref : (Bp, CP)      logits (padded).
    """
    T, B, _ = gin_ref.shape
    Hp = whh_ref.shape[0]

    whh = whh_ref[...]                       # hoisted once; resident across the loop

    def step(t, carry):
        h, c = carry
        # input projection + bias already folded into gin_ref -> only one matmul per step
        gates = gin_ref[t] + jnp.dot(h, whh, preferred_element_type=jnp.float32)
        i = jax.nn.sigmoid(gates[:, 0 * Hp:1 * Hp])   # 128-lane aligned slices
        f = jax.nn.sigmoid(gates[:, 1 * Hp:2 * Hp])
        g = jnp.tanh(gates[:, 2 * Hp:3 * Hp])
        o = jax.nn.sigmoid(gates[:, 3 * Hp:4 * Hp])
        c_new = f * c + i * g
        h_new = o * jnp.tanh(c_new)
        return (h_new, c_new)

    h0 = jnp.zeros((B, Hp), jnp.float32)
    c0 = jnp.zeros((B, Hp), jnp.float32)
    # T is static & small: fully unroll so the scheduler can overlap the MXU recurrence
    # matmul with the EUP sigmoid/tanh of the previous iteration.
    h_last, _ = lax.fori_loop(0, T, step, (h0, c0), unroll=True)

    # nn.Dropout(0.3) in eval mode is the identity.
    # TODO(synk): training-mode dropout (random mask + 1/(1-p) scaling) not implemented.
    out_ref[...] = (jnp.dot(h_last, wfc_ref[...], preferred_element_type=jnp.float32)
                    + bfc_ref[...])


def prepare_params(params):
    """One-time layout prep: fuse embedding with the input projection + biases, and pad
    hidden / class dims so each gate (and the logits) occupies a full 128-lane block."""
    emb = params["embedding"]                 # (V, E)
    w_ih = params["w_ih"]                     # (4H, E)
    w_hh = params["w_hh"]                     # (4H, H)
    bias = params["b_ih"] + params["b_hh"]    # (4H,)
    w_fc = params["w_fc"]                     # (C, H)
    b_fc = params["b_fc"]                     # (C,)

    H = w_hh.shape[1]
    C = w_fc.shape[0]
    assert H <= HP and C <= CP

    # Fused embedding + input projection (+ bias): one (V,E)x(E,4H) matmul replaces
    # T per-timestep (B,E)x(E,4H) matmuls on the serial critical path.
    gate_tab = jnp.dot(emb, jnp.transpose(w_ih),
                       precision=jax.lax.Precision.HIGHEST) + bias        # (V, 4H)

    gate_tab_p = jnp.zeros((emb.shape[0], 4 * HP), jnp.float32)
    w_hh_p = jnp.zeros((HP, 4 * HP), jnp.float32)
    w_hh_t = jnp.transpose(w_hh)                                          # (H, 4H)
    for k in range(4):   # PyTorch gate order i, f, g, o -> one 128-lane block each
        gate_tab_p = gate_tab_p.at[:, k * HP:k * HP + H].set(gate_tab[:, k * H:(k + 1) * H])
        w_hh_p = w_hh_p.at[:H, k * HP:k * HP + H].set(w_hh_t[:, k * H:(k + 1) * H])
    # Padded hidden lanes see zero pre-activations -> i=f=o=0.5, g=0 -> h=c=0 forever;
    # zero-padded Wfc rows keep them out of the logits.

    w_fc_p = jnp.zeros((HP, CP), jnp.float32).at[:H, :C].set(jnp.transpose(w_fc))
    b_fc_p = jnp.zeros((1, CP), jnp.float32).at[0, :C].set(b_fc)

    return {"gate_tab": gate_tab_p, "w_hh": w_hh_p, "w_fc": w_fc_p, "b_fc": b_fc_p}


@functools.partial(jax.jit, static_argnames=("num_classes",))
def lstm_classifier_forward(x_ids, prep, *, num_classes):
    """x_ids: int32 (B, T).  Returns logits (B, num_classes) float32."""
    B, T = x_ids.shape
    Bp = max(SUBLANES, ((B + SUBLANES - 1) // SUBLANES) * SUBLANES)

    ids_tm = jnp.transpose(x_ids)                       # (T, B) -- tiny index transpose
    if Bp != B:
        ids_tm = jnp.pad(ids_tm, ((0, 0), (0, Bp - B)))  # pad batch to sublane multiple

    # Gather gate pre-activations directly in time-major layout: (T, Bp, 4*HP).
    gates_in = jnp.take(prep["gate_tab"], ids_tm, axis=0)

    vmem = pl.BlockSpec(memory_space=pltpu.MemorySpace.VMEM)
    out_p = pl.pallas_call(
        lstm_classifier_kernel,
        out_shape=jax.ShapeDtypeStruct((Bp, CP), jnp.float32),
        in_specs=[vmem, vmem, vmem, vmem],
        out_specs=vmem,
    )(gates_in, prep["w_hh"], prep["w_fc"], prep["b_fc"])

    return out_p[:B, :num_classes]


def init_params(key, vocab_size, embedding_dim, hidden_dim, num_classes):
    """Deterministic synthetic parameters with the same shapes as the PyTorch module."""
    ks = jax.random.split(key, 7)
    H = hidden_dim
    scale = 1.0 / jnp.sqrt(jnp.float32(H))
    w_ih = jax.random.uniform(ks[0], (4 * H, embedding_dim), jnp.float32, -scale, scale)
    w_hh = jax.random.uniform(ks[1], (4 * H, H), jnp.float32, -scale, scale)
    b_ih = jax.random.uniform(ks[2], (4 * H,), jnp.float32, -scale, scale)
    b_hh = jax.random.uniform(ks[3], (4 * H,), jnp.float32, -scale, scale)
    w_fc = jax.random.uniform(ks[4], (num_classes, H), jnp.float32, -scale, scale)
    b_fc = jax.random.uniform(ks[5], (num_classes,), jnp.float32, -scale, scale)
    emb = jax.random.normal(ks[6], (vocab_size, embedding_dim), jnp.float32)
    return {"embedding": emb, "w_ih": w_ih, "w_hh": w_hh,
            "b_ih": b_ih, "b_hh": b_hh, "w_fc": w_fc, "b_fc": b_fc}


def reference_forward(x_ids, params):
    """Plain-JAX reference matching the PyTorch module (eval mode)."""
    emb = jnp.take(params["embedding"], x_ids, axis=0)        # (B, T, E)
    w_ih, w_hh = params["w_ih"], params["w_hh"]
    b = params["b_ih"] + params["b_hh"]
    H = w_hh.shape[1]
    B, T, _ = emb.shape
    hi = jax.lax.Precision.HIGHEST
    h = jnp.zeros((B, H), jnp.float32)
    c = jnp.zeros((B, H), jnp.float32)
    for t in range(T):
        gates = (jnp.dot(emb[:, t], w_ih.T, precision=hi)
                 + jnp.dot(h, w_hh.T, precision=hi) + b)
        i = jax.nn.sigmoid(gates[:, 0 * H:1 * H])
        f = jax.nn.sigmoid(gates[:, 1 * H:2 * H])
        g = jnp.tanh(gates[:, 2 * H:3 * H])
        o = jax.nn.sigmoid(gates[:, 3 * H:4 * H])
        c = f * c + i * g
        h = o * jnp.tanh(c)
    return jnp.dot(h, params["w_fc"].T, precision=hi) + params["b_fc"]


if __name__ == "__main__":
    vocab_size = 50
    embedding_dim = 16
    hidden_dim = 32
    num_classes = 4
    batch = 2
    seq_len = 8

    key = jax.random.PRNGKey(0)
    k_param, k_data = jax.random.split(key)
    params = init_params(k_param, vocab_size, embedding_dim, hidden_dim, num_classes)
    x_ids = jax.random.randint(k_data, (batch, seq_len), 0, vocab_size, dtype=jnp.int32)

    prep = prepare_params(params)
    logits = lstm_classifier_forward(x_ids, prep, num_classes=num_classes)
    jax.block_until_ready(logits)
    assert logits.shape == (batch, num_classes)

    ref = reference_forward(x_ids, params)
    assert jnp.allclose(logits, ref, atol=1e-2, rtol=1e-2), (
        f"max abs diff {float(jnp.max(jnp.abs(logits - ref)))}")

    print("KERNEL_OK")
</pallas_src>

<mosaic_0001>
module attributes {stable_mosaic.version = 11 : i64} {
  func.func @lstm_classifier_kernel(%arg0: memref<8x8x512xf32, #tpu.memory_space<vmem>>, %arg1: memref<128x512xf32, #tpu.memory_space<vmem>>, %arg2: memref<128x128xf32, #tpu.memory_space<vmem>>, %arg3: memref<1x128xf32, #tpu.memory_space<vmem>>, %arg4: memref<8x128xf32, #tpu.memory_space<vmem>>) attributes {dimension_semantics = [], scalar_prefetch = 0 : i64, scratch_operands = 0 : i64, tpu.core_type = #tpu.core_type<tc>} {
    %c0 = arith.constant 0 : index
    %c0_0 = arith.constant 0 : index
    %0 = vector.load %arg1[%c0, %c0_0] : memref<128x512xf32, #tpu.memory_space<vmem>>, vector<128x512xf32>
    %cst = arith.constant 0.000000e+00 : f32
    %1 = vector.broadcast %cst : f32 to vector<8x128xf32>
    %cst_1 = arith.constant 0.000000e+00 : f32
    %2 = vector.broadcast %cst_1 : f32 to vector<8x128xf32>
    %c0_i32 = arith.constant 0 : i32
    %3 = arith.index_cast %c0_i32 : i32 to index
    %c0_2 = arith.constant 0 : index
    %c0_3 = arith.constant 0 : index
    %4 = vector.load %arg0[%3, %c0_2, %c0_3] : memref<8x8x512xf32, #tpu.memory_space<vmem>>, vector<1x8x512xf32>
    %5 = vector.shape_cast %4 : vector<1x8x512xf32> to vector<8x512xf32>
    %cst_4 = arith.constant dense<0.000000e+00> : vector<8x512xf32>
    %6 = tpu.matmul %1, %0, %cst_4 {dimension_numbers = #tpu.dot_dimension_numbers<[1], [0], [0], [1], [0, 0, 1, 1], [], []>} : vector<8x128xf32>, vector<128x512xf32>, vector<8x512xf32> -> vector<8x512xf32>
    %7 = arith.addf %5, %6 : vector<8x512xf32>
    %8 = vector.extract_strided_slice %7 {offsets = [0, 0], sizes = [8, 128], strides = [1, 1]} : vector<8x512xf32> to vector<8x128xf32>
    %9 = arith.negf %8 : vector<8x128xf32>
    %10 = math.exp %9 : vector<8x128xf32>
    %cst_5 = arith.constant 1.000000e+00 : f32
    %11 = vector.broadcast %cst_5 : f32 to vector<8x128xf32>
    %12 = arith.addf %11, %10 : vector<8x128xf32>
    %13 = arith.divf %11, %12 : vector<8x128xf32>
    %14 = vector.extract_strided_slice %7 {offsets = [0, 128], sizes = [8, 128], strides = [1, 1]} : vector<8x512xf32> to vector<8x128xf32>
    %15 = arith.negf %14 : vector<8x128xf32>
    %16 = math.exp %15 : vector<8x128xf32>
    %cst_6 = arith.constant 1.000000e+00 : f32
    %17 = vector.broadcast %cst_6 : f32 to vector<8x128xf32>
    %18 = arith.addf %17, %16 : vector<8x128xf32>
    %19 = arith.divf %17, %18 : vector<8x128xf32>
    %20 = vector.extract_strided_slice %7 {offsets = [0, 256], sizes = [8, 128], strides = [1, 1]} : vector<8x512xf32> to vector<8x128xf32>
    %21 = math.tanh %20 : vector<8x128xf32>
    %22 = vector.extract_strided_slice %7 {offsets = [0, 384], sizes = [8, 128], strides = [1, 1]} : vector<8x512xf32> to vector<8x128xf32>
    %23 = arith.negf %22 : vector<8x128xf32>
    %24 = math.exp %23 : vector<8x128xf32>
    %cst_7 = arith.constant 1.000000e+00 : f32
    %25 = vector.broadcast %cst_7 : f32 to vector<8x128xf32>
    %26 = arith.addf %25, %24 : vector<8x128xf32>
    %27 = arith.divf %25, %26 : vector<8x128xf32>
    %28 = arith.mulf %19, %2 : vector<8x128xf32>
    %29 = arith.mulf %13, %21 : vector<8x128xf32>
    %30 = arith.addf %28, %29 : vector<8x128xf32>
    %31 = math.tanh %30 : vector<8x128xf32>
    %32 = arith.mulf %27, %31 : vector<8x128xf32>
    %c1_i32 = arith.constant 1 : i32
    %33 = arith.index_cast %c1_i32 : i32 to index
    %c0_8 = arith.constant 0 : index
    %c0_9 = arith.constant 0 : index
    %34 = vector.load %arg0[%33, %c0_8, %c0_9] : memref<8x8x512xf32, #tpu.memory_space<vmem>>, vector<1x8x512xf32>
    %35 = vector.shape_cast %34 : vector<1x8x512xf32> to vector<8x512xf32>
    %cst_10 = arith.constant dense<0.000000e+00> : vector<8x512xf32>
    %36 = tpu.matmul %32, %0, %cst_10 {dimension_numbers = #tpu.dot_dimension_numbers<[1], [0], [0], [1], [0, 0, 1, 1], [], []>} : vector<8x128xf32>, vector<128x512xf32>, vector<8x512xf32> -> vector<8x512xf32>
    %37 = arith.addf %35, %36 : vector<8x512xf32>
    %38 = vector.extract_strided_slice %37 {offsets = [0, 0], sizes = [8, 128], strides = [1, 1]} : vector<8x512xf32> to vector<8x128xf32>
    %39 = arith.negf %38 : vector<8x128xf32>
    %40 = math.exp %39 : vector<8x128xf32>
    %cst_11 = arith.constant 1.000000e+00 : f32
    %41 = vector.broadcast %cst_11 : f32 to vector<8x128xf32>
    %42 = arith.addf %41, %40 : vector<8x128xf32>
    %43 = arith.divf %41, %42 : vector<8x128xf32>
    %44 = vector.extract_strided_slice %37 {offsets = [0, 128], sizes = [8, 128], strides = [1, 1]} : vector<8x512xf32> to vector<8x128xf32>
    %45 = arith.negf %44 : vector<8x128xf32>
    %46 = math.exp %45 : vector<8x128xf32>
    %cst_12 = arith.constant 1.000000e+00 : f32
    %47 = vector.broadcast %cst_12 : f32 to vector<8x128xf32>
    %48 = arith.addf %47, %46 : vector<8x128xf32>
    %49 = arith.divf %47, %48 : vector<8x128xf32>
    %50 = vector.extract_strided_slice %37 {offsets = [0, 256], sizes = [8, 128], strides = [1, 1]} : vector<8x512xf32> to vector<8x128xf32>
    %51 = math.tanh %50 : vector<8x128xf32>
    %52 = vector.extract_strided_slice %37 {offsets = [0, 384], sizes = [8, 128], strides = [1, 1]} : vector<8x512xf32> to vector<8x128xf32>
    %53 = arith.negf %52 : vector<8x128xf32>
    %54 = math.exp %53 : vector<8x128xf32>
    %cst_13 = arith.constant 1.000000e+00 : f32
    %55 = vector.broadcast %cst_13 : f32 to vector<8x128xf32>
    %56 = arith.addf %55, %54 : vector<8x128xf32>
    %57 = arith.divf %55, %56 : vector<8x128xf32>
    %58 = arith.mulf %49, %30 : vector<8x128xf32>
    %59 = arith.mulf %43, %51 : vector<8x128xf32>
    %60 = arith.addf %58, %59 : vector<8x128xf32>
    %61 = math.tanh %60 : vector<8x128xf32>
    %62 = arith.mulf %57, %61 : vector<8x128xf32>
    %c2_i32 = arith.constant 2 : i32
    %63 = arith.index_cast %c2_i32 : i32 to index
    %c0_14 = arith.constant 0 : index
    %c0_15 = arith.constant 0 : index
    %64 = vector.load %arg0[%63, %c0_14, %c0_15] : memref<8x8x512xf32, #tpu.memory_space<vmem>>, vector<1x8x512xf32>
    %65 = vector.shape_cast %64 : vector<1x8x512xf32> to vector<8x512xf32>
    %cst_16 = arith.constant dense<0.000000e+00> : vector<8x512xf32>
    %66 = tpu.matmul %62, %0, %cst_16 {dimension_numbers = #tpu.dot_dimension_numbers<[1], [0], [0], [1], [0, 0, 1, 1], [], []>} : vector<8x128xf32>, vector<128x512xf32>, vector<8x512xf32> -> vector<8x512xf32>
    %67 = arith.addf %65, %66 : vector<8x512xf32>
    %68 = vector.extract_strided_slice %67 {offsets = [0, 0], sizes = [8, 128], strides = [1, 1]} : vector<8x512xf32> to vector<8x128xf32>
    %69 = arith.negf %68 : vector<8x128xf32>
    %70 = math.exp %69 : vector<8x128xf32>
    %cst_17 = arith.constant 1.000000e+00 : f32
    %71 = vector.broadcast %cst_17 : f32 to vector<8x128xf32>
    %72 = arith.addf %71, %70 : vector<8x128xf32>
    %73 = arith.divf %71, %72 : vector<8x128xf32>
    %74 = vector.extract_strided_slice %67 {offsets = [0, 128], sizes = [8, 128], strides = [1, 1]} : vector<8x512xf32> to vector<8x128xf32>
    %75 = arith.negf %74 : vector<8x128xf32>
    %76 = math.exp %75 : vector<8x128xf32>
    %cst_18 = arith.constant 1.000000e+00 : f32
    %77 = vector.broadcast %cst_18 : f32 to vector<8x128xf32>
    %78 = arith.addf %77, %76 : vector<8x128xf32>
    %79 = arith.divf %77, %78 : vector<8x128xf32>
    %80 = vector.extract_strided_slice %67 {offsets = [0, 256], sizes = [8, 128], strides = [1, 1]} : vector<8x512xf32> to vector<8x128xf32>
    %81 = math.tanh %80 : vector<8x128xf32>
    %82 = vector.extract_strided_slice %67 {offsets = [0, 384], sizes = [8, 128], strides = [1, 1]} : vector<8x512xf32> to vector<8x128xf32>
    %83 = arith.negf %82 : vector<8x128xf32>
    %84 = math.exp %83 : vector<8x128xf32>
    %cst_19 = arith.constant 1.000000e+00 : f32
    %85 = vector.broadcast %cst_19 : f32 to vector<8x128xf32>
    %86 = arith.addf %85, %84 : vector<8x128xf32>
    %87 = arith.divf %85, %86 : vector<8x128xf32>
    %88 = arith.mulf %79, %60 : vector<8x128xf32>
    %89 = arith.mulf %73, %81 : vector<8x128xf32>
    %90 = arith.addf %88, %89 : vector<8x128xf32>
    %91 = math.tanh %90 : vector<8x128xf32>
    %92 = arith.mulf %87, %91 : vector<8x128xf32>
    %c3_i32 = arith.constant 3 : i32
    %93 = arith.index_cast %c3_i32 : i32 to index
    %c0_20 = arith.constant 0 : index
    %c0_21 = arith.constant 0 : index
    %94 = vector.load %arg0[%93, %c0_20, %c0_21] : memref<8x8x512xf32, #tpu.memory_space<vmem>>, vector<1x8x512xf32>
    %95 = vector.shape_cast %94 : vector<1x8x512xf32> to vector<8x512xf32>
    %cst_22 = arith.constant dense<0.000000e+00> : vector<8x512xf32>
    %96 = tpu.matmul %92, %0, %cst_22 {dimension_numbers = #tpu.dot_dimension_numbers<[1], [0], [0], [1], [0, 0, 1, 1], [], []>} : vector<8x128xf32>, vector<128x512xf32>, vector<8x512xf32> -> vector<8x512xf32>
    %97 = arith.addf %95, %96 : vector<8x512xf32>
    %98 = vector.extract_strided_slice %97 {offsets = [0, 0], sizes = [8, 128], strides = [1, 1]} : vector<8x512xf32> to vector<8x128xf32>
    %99 = arith.negf %98 : vector<8x128xf32>
    %100 = math.exp %99 : vector<8x128xf32>
    %cst_23 = arith.constant 1.000000e+00 : f32
    %101 = vector.broadcast %cst_23 : f32 to vector<8x128xf32>
    %102 = arith.addf %101, %100 : vector<8x128xf32>
    %103 = arith.divf %101, %102 : vector<8x128xf32>
    %104 = vector.extract_strided_slice %97 {offsets = [0, 128], sizes = [8, 128], strides = [1, 1]} : vector<8x512xf32> to vector<8x128xf32>
    %105 = arith.negf %104 : vector<8x128xf32>
    %106 = math.exp %105 : vector<8x128xf32>
    %cst_24 = arith.constant 1.000000e+00 : f32
    %107 = vector.broadcast %cst_24 : f32 to vector<8x128xf32>
    %108 = arith.addf %107, %106 : vector<8x128xf32>
    %109 = arith.divf %107, %108 : vector<8x128xf32>
    %110 = vector.extract_strided_slice %97 {offsets = [0, 256], sizes = [8, 128], strides = [1, 1]} : vector<8x512xf32> to vector<8x128xf32>
    %111 = math.tanh %110 : vector<8x128xf32>
    %112 = vector.extract_strided_slice %97 {offsets = [0, 384], sizes = [8, 128], strides = [1, 1]} : vector<8x512xf32> to vector<8x128xf32>
    %113 = arith.negf %112 : vector<8x128xf32>
    %114 = math.exp %113 : vector<8x128xf32>
    %cst_25 = arith.constant 1.000000e+00 : f32
    %115 = vector.broadcast %cst_25 : f32 to vector<8x128xf32>
    %116 = arith.addf %115, %114 : vector<8x128xf32>
    %117 = arith.divf %115, %116 : vector<8x128xf32>
    %118 = arith.mulf %109, %90 : vector<8x128xf32>
    %119 = arith.mulf %103, %111 : vector<8x128xf32>
    %120 = arith.addf %118, %119 : vector<8x128xf32>
    %121 = math.tanh %120 : vector<8x128xf32>
    %122 = arith.mulf %117, %121 : vector<8x128xf32>
    %c4_i32 = arith.constant 4 : i32
    %123 = arith.index_cast %c4_i32 : i32 to index
    %c0_26 = arith.constant 0 : index
    %c0_27 = arith.constant 0 : index
    %124 = vector.load %arg0[%123, %c0_26, %c0_27] : memref<8x8x512xf32, #tpu.memory_space<vmem>>, vector<1x8x512xf32>
    %125 = vector.shape_cast %124 : vector<1x8x512xf32> to vector<8x512xf32>
    %cst_28 = arith.constant dense<0.000000e+00> : vector<8x512xf32>
    %126 = tpu.matmul %122, %0, %cst_28 {dimension_numbers = #tpu.dot_dimension_numbers<[1], [0], [0], [1], [0, 0, 1, 1], [], []>} : vector<8x128xf32>, vector<128x512xf32>, vector<8x512xf32> -> vector<8x512xf32>
    %127 = arith.addf %125, %126 : vector<8x512xf32>
    %128 = vector.extract_strided_slice %127 {offsets = [0, 0], sizes = [8, 128], strides = [1, 1]} : vector<8x512xf32> to vector<8x128xf32>
    %129 = arith.negf %128 : vector<8x128xf32>
    %130 = math.exp %129 : vector<8x128xf32>
    %cst_29 = arith.constant 1.000000e+00 : f32
    %131 = vector.broadcast %cst_29 : f32 to vector<8x128xf32>
    %132 = arith.addf %131, %130 : vector<8x128xf32>
    %133 = arith.divf %131, %132 : vector<8x128xf32>
    %134 = vector.extract_strided_slice %127 {offsets = [0, 128], sizes = [8, 128], strides = [1, 1]} : vector<8x512xf32> to vector<8x128xf32>
    %135 = arith.negf %134 : vector<8x128xf32>
    %136 = math.exp %135 : vector<8x128xf32>
    %cst_30 = arith.constant 1.000000e+00 : f32
    %137 = vector.broadcast %cst_30 : f32 to vector<8x128xf32>
    %138 = arith.addf %137, %136 : vector<8x128xf32>
    %139 = arith.divf %137, %138 : vector<8x128xf32>
    %140 = vector.extract_strided_slice %127 {offsets = [0, 256], sizes = [8, 128], strides = [1, 1]} : vector<8x512xf32> to vector<8x128xf32>
    %141 = math.tanh %140 : vector<8x128xf32>
    %142 = vector.extract_strided_slice %127 {offsets = [0, 384], sizes = [8, 128], strides = [1, 1]} : vector<8x512xf32> to vector<8x128xf32>
    %143 = arith.negf %142 : vector<8x128xf32>
    %144 = math.exp %143 : vector<8x128xf32>
    %cst_31 = arith.constant 1.000000e+00 : f32
    %145 = vector.broadcast %cst_31 : f32 to vector<8x128xf32>
    %146 = arith.addf %145, %144 : vector<8x128xf32>
    %147 = arith.divf %145, %146 : vector<8x128xf32>
    %148 = arith.mulf %139, %120 : vector<8x128xf32>
    %149 = arith.mulf %133, %141 : vector<8x128xf32>
    %150 = arith.addf %148, %149 : vector<8x128xf32>
    %151 = math.tanh %150 : vector<8x128xf32>
    %152 = arith.mulf %147, %151 : vector<8x128xf32>
    %c5_i32 = arith.constant 5 : i32
    %153 = arith.index_cast %c5_i32 : i32 to index
    %c0_32 = arith.constant 0 : index
    %c0_33 = arith.constant 0 : index
    %154 = vector.load %arg0[%153, %c0_32, %c0_33] : memref<8x8x512xf32, #tpu.memory_space<vmem>>, vector<1x8x512xf32>
    %155 = vector.shape_cast %154 : vector<1x8x512xf32> to vector<8x512xf32>
    %cst_34 = arith.constant dense<0.000000e+00> : vector<8x512xf32>
    %156 = tpu.matmul %152, %0, %cst_34 {dimension_numbers = #tpu.dot_dimension_numbers<[1], [0], [0], [1], [0, 0, 1, 1], [], []>} : vector<8x128xf32>, vector<128x512xf32>, vector<8x512xf32> -> vector<8x512xf32>
    %157 = arith.addf %155, %156 : vector<8x512xf32>
    %158 = vector.extract_strided_slice %157 {offsets = [0, 0], sizes = [8, 128], strides = [1, 1]} : vector<8x512xf32> to vector<8x128xf32>
    %159 = arith.negf %158 : vector<8x128xf32>
    %160 = math.exp %159 : vector<8x128xf32>
    %cst_35 = arith.constant 1.000000e+00 : f32
    %161 = vector.broadcast %cst_35 : f32 to vector<8x128xf32>
    %162 = arith.addf %161, %160 : vector<8x128xf32>
    %163 = arith.divf %161, %162 : vector<8x128xf32>
    %164 = vector.extract_strided_slice %157 {offsets = [0, 128], sizes = [8, 128], strides = [1, 1]} : vector<8x512xf32> to vector<8x128xf32>
    %165 = arith.negf %164 : vector<8x128xf32>
    %166 = math.exp %165 : vector<8x128xf32>
    %cst_36 = arith.constant 1.000000e+00 : f32
    %167 = vector.broadcast %cst_36 : f32 to vector<8x128xf32>
    %168 = arith.addf %167, %166 : vector<8x128xf32>
    %169 = arith.divf %167, %168 : vector<8x128xf32>
    %170 = vector.extract_strided_slice %157 {offsets = [0, 256], sizes = [8, 128], strides = [1, 1]} : vector<8x512xf32> to vector<8x128xf32>
    %171 = math.tanh %170 : vector<8x128xf32>
    %172 = vector.extract_strided_slice %157 {offsets = [0, 384], sizes = [8, 128], strides = [1, 1]} : vector<8x512xf32> to vector<8x128xf32>
    %173 = arith.negf %172 : vector<8x128xf32>
    %174 = math.exp %173 : vector<8x128xf32>
    %cst_37 = arith.constant 1.000000e+00 : f32
    %175 = vector.broadcast %cst_37 : f32 to vector<8x128xf32>
    %176 = arith.addf %175, %174 : vector<8x128xf32>
    %177 = arith.divf %175, %176 : vector<8x128xf32>
    %178 = arith.mulf %169, %150 : vector<8x128xf32>
    %179 = arith.mulf %163, %171 : vector<8x128xf32>
    %180 = arith.addf %178, %179 : vector<8x128xf32>
    %181 = math.tanh %180 : vector<8x128xf32>
    %182 = arith.mulf %177, %181 : vector<8x128xf32>
    %c6_i32 = arith.constant 6 : i32
    %183 = arith.index_cast %c6_i32 : i32 to index
    %c0_38 = arith.constant 0 : index
    %c0_39 = arith.constant 0 : index
    %184 = vector.load %arg0[%183, %c0_38, %c0_39] : memref<8x8x512xf32, #tpu.memory_space<vmem>>, vector<1x8x512xf32>
    %185 = vector.shape_cast %184 : vector<1x8x512xf32> to vector<8x512xf32>
    %cst_40 = arith.constant dense<0.000000e+00> : vector<8x512xf32>
    %186 = tpu.matmul %182, %0, %cst_40 {dimension_numbers = #tpu.dot_dimension_numbers<[1], [0], [0], [1], [0, 0, 1, 1], [], []>} : vector<8x128xf32>, vector<128x512xf32>, vector<8x512xf32> -> vector<8x512xf32>
    %187 = arith.addf %185, %186 : vector<8x512xf32>
    %188 = vector.extract_strided_slice %187 {offsets = [0, 0], sizes = [8, 128], strides = [1, 1]} : vector<8x512xf32> to vector<8x128xf32>
    %189 = arith.negf %188 : vector<8x128xf32>
    %190 = math.exp %189 : vector<8x128xf32>
    %cst_41 = arith.constant 1.000000e+00 : f32
    %191 = vector.broadcast %cst_41 : f32 to vector<8x128xf32>
    %192 = arith.addf %191, %190 : vector<8x128xf32>
    %193 = arith.divf %191, %192 : vector<8x128xf32>
    %194 = vector.extract_strided_slice %187 {offsets = [0, 128], sizes = [8, 128], strides = [1, 1]} : vector<8x512xf32> to vector<8x128xf32>
    %195 = arith.negf %194 : vector<8x128xf32>
    %196 = math.exp %195 : vector<8x128xf32>
    %cst_42 = arith.constant 1.000000e+00 : f32
    %197 = vector.broadcast %cst_42 : f32 to vector<8x128xf32>
    %198 = arith.addf %197, %196 : vector<8x128xf32>
    %199 = arith.divf %197, %198 : vector<8x128xf32>
    %200 = vector.extract_strided_slice %187 {offsets = [0, 256], sizes = [8, 128], strides = [1, 1]} : vector<8x512xf32> to vector<8x128xf32>
    %201 = math.tanh %200 : vector<8x128xf32>
    %202 = vector.extract_strided_slice %187 {offsets = [0, 384], sizes = [8, 128], strides = [1, 1]} : vector<8x512xf32> to vector<8x128xf32>
    %203 = arith.negf %202 : vector<8x128xf32>
    %204 = math.exp %203 : vector<8x128xf32>
    %cst_43 = arith.constant 1.000000e+00 : f32
    %205 = vector.broadcast %cst_43 : f32 to vector<8x128xf32>
    %206 = arith.addf %205, %204 : vector<8x128xf32>
    %207 = arith.divf %205, %206 : vector<8x128xf32>
    %208 = arith.mulf %199, %180 : vector<8x128xf32>
    %209 = arith.mulf %193, %201 : vector<8x128xf32>
    %210 = arith.addf %208, %209 : vector<8x128xf32>
    %211 = math.tanh %210 : vector<8x128xf32>
    %212 = arith.mulf %207, %211 : vector<8x128xf32>
    %c7_i32 = arith.constant 7 : i32
    %213 = arith.index_cast %c7_i32 : i32 to index
    %c0_44 = arith.constant 0 : index
    %c0_45 = arith.constant 0 : index
    %214 = vector.load %arg0[%213, %c0_44, %c0_45] : memref<8x8x512xf32, #tpu.memory_space<vmem>>, vector<1x8x512xf32>
    %215 = vector.shape_cast %214 : vector<1x8x512xf32> to vector<8x512xf32>
    %cst_46 = arith.constant dense<0.000000e+00> : vector<8x512xf32>
    %216 = tpu.matmul %212, %0, %cst_46 {dimension_numbers = #tpu.dot_dimension_numbers<[1], [0], [0], [1], [0, 0, 1, 1], [], []>} : vector<8x128xf32>, vector<128x512xf32>, vector<8x512xf32> -> vector<8x512xf32>
    %217 = arith.addf %215, %216 : vector<8x512xf32>
    %218 = vector.extract_strided_slice %217 {offsets = [0, 0], sizes = [8, 128], strides = [1, 1]} : vector<8x512xf32> to vector<8x128xf32>
    %219 = arith.negf %218 : vector<8x128xf32>
    %220 = math.exp %219 : vector<8x128xf32>
    %cst_47 = arith.constant 1.000000e+00 : f32
    %221 = vector.broadcast %cst_47 : f32 to vector<8x128xf32>
    %222 = arith.addf %221, %220 : vector<8x128xf32>
    %223 = arith.divf %221, %222 : vector<8x128xf32>
    %224 = vector.extract_strided_slice %217 {offsets = [0, 128], sizes = [8, 128], strides = [1, 1]} : vector<8x512xf32> to vector<8x128xf32>
    %225 = arith.negf %224 : vector<8x128xf32>
    %226 = math.exp %225 : vector<8x128xf32>
    %cst_48 = arith.constant 1.000000e+00 : f32
    %227 = vector.broadcast %cst_48 : f32 to vector<8x128xf32>
    %228 = arith.addf %227, %226 : vector<8x128xf32>
    %229 = arith.divf %227, %228 : vector<8x128xf32>
    %230 = vector.extract_strided_slice %217 {offsets = [0, 256], sizes = [8, 128], strides = [1, 1]} : vector<8x512xf32> to vector<8x128xf32>
    %231 = math.tanh %230 : vector<8x128xf32>
    %232 = vector.extract_strided_slice %217 {offsets = [0, 384], sizes = [8, 128], strides = [1, 1]} : vector<8x512xf32> to vector<8x128xf32>
    %233 = arith.negf %232 : vector<8x128xf32>
    %234 = math.exp %233 : vector<8x128xf32>
    %cst_49 = arith.constant 1.000000e+00 : f32
    %235 = vector.broadcast %cst_49 : f32 to vector<8x128xf32>
    %236 = arith.addf %235, %234 : vector<8x128xf32>
    %237 = arith.divf %235, %236 : vector<8x128xf32>
    %238 = arith.mulf %229, %210 : vector<8x128xf32>
    %239 = arith.mulf %223, %231 : vector<8x128xf32>
    %240 = arith.addf %238, %239 : vector<8x128xf32>
    %241 = math.tanh %240 : vector<8x128xf32>
    %242 = arith.mulf %237, %241 : vector<8x128xf32>
    %c8_i32 = arith.constant 8 : i32
    %c0_50 = arith.constant 0 : index
    %c0_51 = arith.constant 0 : index
    %243 = vector.load %arg2[%c0_50, %c0_51] : memref<128x128xf32, #tpu.memory_space<vmem>>, vector<128x128xf32>
    %cst_52 = arith.constant dense<0.000000e+00> : vector<8x128xf32>
    %244 = tpu.matmul %242, %243, %cst_52 {dimension_numbers = #tpu.dot_dimension_numbers<[1], [0], [0], [1], [0, 0, 1, 1], [], []>} : vector<8x128xf32>, vector<128x128xf32>, vector<8x128xf32> -> vector<8x128xf32>
    %c0_53 = arith.constant 0 : index
    %c0_54 = arith.constant 0 : index
    %245 = vector.load %arg3[%c0_53, %c0_54] : memref<1x128xf32, #tpu.memory_space<vmem>>, vector<1x128xf32>
    %246 = vector.broadcast %245 : vector<1x128xf32> to vector<8x128xf32>
    %247 = arith.addf %244, %246 : vector<8x128xf32>
    %c0_55 = arith.constant 0 : index
    %c0_56 = arith.constant 0 : index
    %248 = vector.load %arg4[%c0_55, %c0_56] : memref<8x128xf32, #tpu.memory_space<vmem>>, vector<8x128xf32>
    tpu.vector_store %arg4[%c0_55, %c0_56], %247 {strides = array<i32>} : memref<8x128xf32, #tpu.memory_space<vmem>>, vector<8x128xf32>,
    return
  }
}

</mosaic_0001>

<llo_original>
// kernel: lstm_classifier_forward.1
$region0: #{lstm_classifier_forward.1}
  #allocation0 [shape = 'u32[]', space=smem, size = 0x4, offset = 0x4, fixed_abs, tag = 'smem constant byte address 0x4 - core index']
  #allocation1 [shape = 'u32[144,128]{1,0:T(1,128)}', space=vmem, size = 0x12000, scoped, tag = 'internal scratch']
  %s0 = inlined_call_operand.vmem [shape: f32[8,8,512], index: 0, kind: input, shape index: {}]
  %s1 = inlined_call_operand.vmem [shape: f32[128,512], index: 1, kind: input, shape index: {}]
  %s2 = inlined_call_operand.vmem [shape: f32[128,128], index: 2, kind: input, shape index: {}]
  %s3 = inlined_call_operand.vmem [shape: f32[1,128], index: 3, kind: input, shape index: {}]
  %s4 = inlined_call_operand.vmem [shape: f32[8,128], index: 4, kind: output, shape index: {}]
  %s5 = sld [smem:[#allocation0]]
  $region26: #{lstm_classifier_forward.1} parent=0
    _
  %s7 = ssub.s32 1, %s5
  %s8 = scalar_select 0, %s7, %s5
  // Predicated region
  $region2: #{lstm_classifier_forward.1} parent=0 // pred_check
    _
  $region3: #{lstm_classifier_forward.1} parent=0 // pred_check_branch
    %10 = sbr.rel (0) target = $region5
  $region4: #{lstm_classifier_forward.1} parent=0 // pred_region
    _
  $region5: #{lstm_classifier_forward.1} parent=0 // pred_fallthru
    _
  // Predicated region
  $region6: #{lstm_classifier_forward.1} parent=0 // pred_check
    _
  $region7: #{lstm_classifier_forward.1} parent=0 // pred_check_branch
    %12 = sbr.rel (0) target = $region9
  $region8: #{lstm_classifier_forward.1} parent=0 // pred_region
    _
  $region9: #{lstm_classifier_forward.1} parent=0 // pred_fallthru
    _
  // Predicated region
  $region10: #{lstm_classifier_forward.1} parent=0 // pred_check
    _
  $region11: #{lstm_classifier_forward.1} parent=0 // pred_check_branch
    %14 = sbr.rel (0) target = $region13
  $region12: #{lstm_classifier_forward.1} parent=0 // pred_region
    _
  $region13: #{lstm_classifier_forward.1} parent=0 // pred_fallthru
    _
  // Predicated region
  $region14: #{lstm_classifier_forward.1} parent=0 // pred_check
    _
  $region15: #{lstm_classifier_forward.1} parent=0 // pred_check_branch
    %16 = sbr.rel (0) target = $region17
  $region16: #{lstm_classifier_forward.1} parent=0 // pred_region
    _
  $region17: #{lstm_classifier_forward.1} parent=0 // pred_fallthru
    _
  %v17 = vld [vmem:[%s1] sm:$0xff]
  %v18 = vld [vmem:[%s1 + $0x8] sm:$0xff]
  %v19 = vld [vmem:[%s1 + $0x10] sm:$0xff]
  %v20 = vld [vmem:[%s1 + $0x18] sm:$0xff]
  %v21 = vld [vmem:[%s1 + $0x20] sm:$0xff]
  %v22 = vld [vmem:[%s1 + $0x28] sm:$0xff]
  %v23 = vld [vmem:[%s1 + $0x30] sm:$0xff]
  %v24 = vld [vmem:[%s1 + $0x38] sm:$0xff]
  %v25 = vld [vmem:[%s1 + $0x40] sm:$0xff]
  %v26 = vld [vmem:[%s1 + $0x48] sm:$0xff]
  %v27 = vld [vmem:[%s1 + $0x50] sm:$0xff]
  %v28 = vld [vmem:[%s1 + $0x58] sm:$0xff]
  %v29 = vld [vmem:[%s1 + $0x60] sm:$0xff]
  %v30 = vld [vmem:[%s1 + $0x68] sm:$0xff]
  %v31 = vld [vmem:[%s1 + $0x70] sm:$0xff]
  %v32 = vld [vmem:[%s1 + $0x78] sm:$0xff]
  %v33 = vld [vmem:[%s1 + $0x80] sm:$0xff]
  %v34 = vld [vmem:[%s1 + $0x88] sm:$0xff]
  %v35 = vld [vmem:[%s1 + $0x90] sm:$0xff]
  %v36 = vld [vmem:[%s1 + $0x98] sm:$0xff]
  %v37 = vld [vmem:[%s1 + $0xa0] sm:$0xff]
  %v38 = vld [vmem:[%s1 + $0xa8] sm:$0xff]
  %v39 = vld [vmem:[%s1 + $0xb0] sm:$0xff]
  %v40 = vld [vmem:[%s1 + $0xb8] sm:$0xff]
  %v41 = vld [vmem:[%s1 + $0xc0] sm:$0xff]
  %v42 = vld [vmem:[%s1 + $0xc8] sm:$0xff]
  %v43 = vld [vmem:[%s1 + $0xd0] sm:$0xff]
  %v44 = vld [vmem:[%s1 + $0xd8] sm:$0xff]
  %v45 = vld [vmem:[%s1 + $0xe0] sm:$0xff]
  %v46 = vld [vmem:[%s1 + $0xe8] sm:$0xff]
  %v47 = vld [vmem:[%s1 + $0xf0] sm:$0xff]
  %v48 = vld [vmem:[%s1 + $0xf8] sm:$0xff]
  %v49 = vld [vmem:[%s1 + $0x100] sm:$0xff]
  %v50 = vld [vmem:[%s1 + $0x108] sm:$0xff]
  %v51 = vld [vmem:[%s1 + $0x110] sm:$0xff]
  %v52 = vld [vmem:[%s1 + $0x118] sm:$0xff]
  %v53 = vld [vmem:[%s1 + $0x120] sm:$0xff]
  %v54 = vld [vmem:[%s1 + $0x128] sm:$0xff]
  %v55 = vld [vmem:[%s1 + $0x130] sm:$0xff]
  %v56 = vld [vmem:[%s1 + $0x138] sm:$0xff]
  %v57 = vld [vmem:[%s1 + $0x140] sm:$0xff]
  %v58 = vld [vmem:[%s1 + $0x148] sm:$0xff]
  %v59 = vld [vmem:[%s1 + $0x150] sm:$0xff]
  %v60 = vld [vmem:[%s1 + $0x158] sm:$0xff]
  %v61 = vld [vmem:[%s1 + $0x160] sm:$0xff]
  %v62 = vld [vmem:[%s1 + $0x168] sm:$0xff]
  %v63 = vld [vmem:[%s1 + $0x170] sm:$0xff]
  %v64 = vld [vmem:[%s1 + $0x178] sm:$0xff]
  %v65 = vld [vmem:[%s1 + $0x180] sm:$0xff]
  %v66 = vld [vmem:[%s1 + $0x188] sm:$0xff]
  %v67 = vld [vmem:[%s1 + $0x190] sm:$0xff]
  %v68 = vld [vmem:[%s1 + $0x198] sm:$0xff]
  %v69 = vld [vmem:[%s1 + $0x1a0] sm:$0xff]
  %v70 = vld [vmem:[%s1 + $0x1a8] sm:$0xff]
  %v71 = vld [vmem:[%s1 + $0x1b0] sm:$0xff]
  %v72 = vld [vmem:[%s1 + $0x1b8] sm:$0xff]
  %v73 = vld [vmem:[%s1 + $0x1c0] sm:$0xff]
  %v74 = vld [vmem:[%s1 + $0x1c8] sm:$0xff]
  %v75 = vld [vmem:[%s1 + $0x1d0] sm:$0xff]
  %v76 = vld [vmem:[%s1 + $0x1d8] sm:$0xff]
  %v77 = vld [vmem:[%s1 + $0x1e0] sm:$0xff]
  %v78 = vld [vmem:[%s1 + $0x1e8] sm:$0xff]
  %v79 = vld [vmem:[%s1 + $0x1f0] sm:$0xff]
  %v80 = vld [vmem:[%s1 + $0x1f8] sm:$0xff]
  %v81 = vld [vmem:[%s0] sm:$0xff]
  %v82 = vld [vmem:[%s0 + $0x8] sm:$0xff]
  %v83 = vld [vmem:[%s0 + $0x10] sm:$0xff]
  %v84 = vld [vmem:[%s0 + $0x18] sm:$0xff]
  %85 = vmatprep.subr.mxu0 %v78
  %86 = vmatpush1.msra.mxu0 %v77
  %87 = vmatprep.subr.mxu0 %v74
  %88 = vmatpush1.msra.mxu0 %v73
  %89 = vmatprep.subr.mxu0 %v70
  %90 = vmatpush1.msra.mxu0 %v69
  %91 = vmatprep.subr.mxu0 %v66
  %92 = vmatpush1.msra.mxu0 %v65
  %93 = vmatprep.subr.mxu0 %v62
  %94 = vmatpush1.msra.mxu0 %v61
  %95 = vmatprep.subr.mxu0 %v58
  %96 = vmatpush1.msra.mxu0 %v57
  %97 = vmatprep.subr.mxu0 %v54
  %98 = vmatpush1.msra.mxu0 %v53
  %99 = vmatprep.subr.mxu0 %v50
  %100 = vmatpush1.msra.mxu0 %v49
  %101 = vmatprep.subr.mxu0 %v46
  %102 = vmatpush1.msra.mxu0 %v45
  %103 = vmatprep.subr.mxu0 %v42
  %104 = vmatpush1.msra.mxu0 %v41
  %105 = vmatprep.subr.mxu0 %v38
  %106 = vmatpush1.msra.mxu0 %v37
  %107 = vmatprep.subr.mxu0 %v34
  %108 = vmatpush1.msra.mxu0 %v33
  %109 = vmatprep.subr.mxu0 %v30
  %110 = vmatpush1.msra.mxu0 %v29
  %111 = vmatprep.subr.mxu0 %v26
  %112 = vmatpush1.msra.mxu0 %v25
  %113 = vmatprep.subr.mxu0 %v22
  %114 = vmatpush1.msra.mxu0 %v21
  %115 = vmatprep.subr.mxu0 %v18
  %116 = vmatpush1.msra.mxu0 %v17
  %117 = vmatprep.subr.mxu0 0.0
  %118 = vmatpush2.msra.mxu0 0.0
  %119 = vmatprep.subr.mxu0 0.0
  %120 = vmatpush2.msra.mxu0 0.0
  %121 = vmatprep.subr.mxu0 0.0
  %122 = vmatpush2.msra.mxu0 0.0
  %123 = vmatprep.subr.mxu0 0.0
  %124 = vmatpush2.msra.mxu0 0.0
  %125 = vmatprep.subr.mxu0 0.0
  %126 = vmatpush2.msra.mxu0 0.0
  %127 = vmatprep.subr.mxu0 0.0
  %128 = vmatpush2.msra.mxu0 0.0
  %129 = vmatprep.subr.mxu0 0.0
  %130 = vmatpush2.msra.mxu0 0.0
  %131 = vmatprep.subr.mxu0 0.0
  %132 = vmatpush2.msra.mxu0 0.0
  %133 = vmatprep.subr.mxu0 0.0
  %134 = vmatpush2.msra.mxu0 0.0
  %135 = vmatprep.subr.mxu0 0.0
  %136 = vmatpush2.msra.mxu0 0.0
  %137 = vmatprep.subr.mxu0 0.0
  %138 = vmatpush2.msra.mxu0 0.0
  %139 = vmatprep.subr.mxu0 0.0
  %140 = vmatpush2.msra.mxu0 0.0
  %141 = vmatprep.subr.mxu0 0.0
  %142 = vmatpush2.msra.mxu0 0.0
  %143 = vmatprep.subr.mxu0 0.0
  %144 = vmatpush2.msra.mxu0 0.0
  %145 = vmatprep.subr.mxu0 0.0
  %146 = vmatpush2.msra.mxu0 0.0
  %147 = vmatprep.subr.mxu0 0.0
  %148 = vmatpush2.msra.mxu0 0.0
  %149 = vmatprep.mubr.f32.mxu0 0.0
  %150 = vmatmul.mubr.f32.gmra.mxu0 0.0
  %v151 = vpop.f32.mrf.mxu0
  %v152 = vadd.f32 0.0, %v151
  %v153 = vpop.f32.mrf.mxu0
  %v154 = vadd.f32 0.0, %v153
  %155 = vdwg.mxu0
  %156 = vmatprep.subr.mxu0 %v80
  %157 = vmatpush1.msra.mxu0 %v79
  %158 = vmatprep.subr.mxu0 %v76
  %159 = vmatpush1.msra.mxu0 %v75
  %160 = vmatprep.subr.mxu0 %v72
  %161 = vmatpush1.msra.mxu0 %v71
  %162 = vmatprep.subr.mxu0 %v68
  %163 = vmatpush1.msra.mxu0 %v67
  %164 = vmatprep.subr.mxu0 %v64
  %165 = vmatpush1.msra.mxu0 %v63
  %166 = vmatprep.subr.mxu0 %v60
  %167 = vmatpush1.msra.mxu0 %v59
  %168 = vmatprep.subr.mxu0 %v56
  %169 = vmatpush1.msra.mxu0 %v55
  %170 = vmatprep.subr.mxu0 %v52
  %171 = vmatpush1.msra.mxu0 %v51
  %172 = vmatprep.subr.mxu0 %v48
  %173 = vmatpush1.msra.mxu0 %v47
  %174 = vmatprep.subr.mxu0 %v44
  %175 = vmatpush1.msra.mxu0 %v43
  %176 = vmatprep.subr.mxu0 %v40
  %177 = vmatpush1.msra.mxu0 %v39
  %178 = vmatprep.subr.mxu0 %v36
  %179 = vmatpush1.msra.mxu0 %v35
  %180 = vmatprep.subr.mxu0 %v32
  %181 = vmatpush1.msra.mxu0 %v31
  %182 = vmatprep.subr.mxu0 %v28
  %183 = vmatpush1.msra.mxu0 %v27
  %184 = vmatprep.subr.mxu0 %v24
  %185 = vmatpush1.msra.mxu0 %v23
  %186 = vmatprep.subr.mxu0 %v20
  %187 = vmatpush1.msra.mxu0 %v19
  %188 = vmatprep.subr.mxu0 0.0
  %189 = vmatpush2.msra.mxu0 0.0
  %190 = vmatprep.subr.mxu0 0.0
  %191 = vmatpush2.msra.mxu0 0.0
  %192 = vmatprep.subr.mxu0 0.0
  %193 = vmatpush2.msra.mxu0 0.0
  %194 = vmatprep.subr.mxu0 0.0
  %195 = vmatpush2.msra.mxu0 0.0
  %196 = vmatprep.subr.mxu0 0.0
  %197 = vmatpush2.msra.mxu0 0.0
  %198 = vmatprep.subr.mxu0 0.0
  %199 = vmatpush2.msra.mxu0 0.0
  %200 = vmatprep.subr.mxu0 0.0
  %201 = vmatpush2.msra.mxu0 0.0
  %202 = vmatprep.subr.mxu0 0.0
  %203 = vmatpush2.msra.mxu0 0.0
  %204 = vmatprep.subr.mxu0 0.0
  %205 = vmatpush2.msra.mxu0 0.0
  %206 = vmatprep.subr.mxu0 0.0
  %207 = vmatpush2.msra.mxu0 0.0
  %208 = vmatprep.subr.mxu0 0.0
  %209 = vmatpush2.msra.mxu0 0.0
  %210 = vmatprep.subr.mxu0 0.0
  %211 = vmatpush2.msra.mxu0 0.0
  %212 = vmatprep.subr.mxu0 0.0
  %213 = vmatpush2.msra.mxu0 0.0
  %214 = vmatprep.subr.mxu0 0.0
  %215 = vmatpush2.msra.mxu0 0.0
  %216 = vmatprep.subr.mxu0 0.0
  %217 = vmatpush2.msra.mxu0 0.0
  %218 = vmatprep.subr.mxu0 0.0
  %219 = vmatpush2.msra.mxu0 0.0
  %220 = vmatprep.mubr.f32.mxu0 0.0
  %221 = vmatmul.mubr.f32.gmra.mxu0 0.0
  %v222 = vpop.f32.mrf.mxu0
  %v223 = vadd.f32 0.0, %v222
  %v224 = vpop.f32.mrf.mxu0
  %v225 = vadd.f32 0.0, %v224
  %226 = vdwg.mxu0
  %v227 = vadd.f32 %v81, %v152
  %v228 = vadd.f32 %v82, %v154
  %v229 = vadd.f32 %v83, %v223
  %v230 = vadd.f32 %v84, %v225
  %v231 = vxor.u32 %v227, 2147483648
  %v232 = vmul.f32 %v231, 1.442695
  %v233 = vpow.pop %v232
  %v234 = vadd.f32 %v233, 1.0
  %v235 = vrcp.pop %v234
  %v236 = vmul.f32 1.0, %v235
  %v237 = vxor.u32 %v228, 2147483648
  %v238 = vmul.f32 %v237, 1.442695
  %v239 = vpow.pop %v238
  %v240 = vadd.f32 %v239, 1.0
  %v241 = vrcp.pop %v240
  %v242 = vmul.f32 1.0, %v241
  %v243 = vtanh.pop %v229
  %v244 = vxor.u32 %v230, 2147483648
  %v245 = vmul.f32 %v244, 1.442695
  %v246 = vpow.pop %v245
  %v247 = vadd.f32 %v246, 1.0
  %v248 = vrcp.pop %v247
  %v249 = vmul.f32 1.0, %v248
  %v250 = vmul.f32 %v242, 0.0
  %v251 = vmul.f32 %v236, %v243
  %v252 = vadd.f32 %v250, %v251
  %v253 = vtanh.pop %v252
  %v254 = vmul.f32 %v249, %v253
  %s255 = scalar_lea.vmem %s0, 32
  %v256 = vld [vmem:[%s255] sm:$0xff]
  %v257 = vld [vmem:[%s255 + $0x8] sm:$0xff]
  %v258 = vld [vmem:[%s255 + $0x10] sm:$0xff]
  %v259 = vld [vmem:[%s255 + $0x18] sm:$0xff]
  %260 = vmatprep.subr.mxu0 %v78
  %261 = vmatpush1.msra.mxu0 %v77
  %262 = vmatprep.subr.mxu0 %v74
  %263 = vmatpush1.msra.mxu0 %v73
  %264 = vmatprep.subr.mxu0 %v70
  %265 = vmatpush1.msra.mxu0 %v69
  %266 = vmatprep.subr.mxu0 %v66
  %267 = vmatpush1.msra.mxu0 %v65
  %268 = vmatprep.subr.mxu0 %v62
  %269 = vmatpush1.msra.mxu0 %v61
  %270 = vmatprep.subr.mxu0 %v58
  %271 = vmatpush1.msra.mxu0 %v57
  %272 = vmatprep.subr.mxu0 %v54
  %273 = vmatpush1.msra.mxu0 %v53
  %274 = vmatprep.subr.mxu0 %v50
  %275 = vmatpush1.msra.mxu0 %v49
  %276 = vmatprep.subr.mxu0 %v46
  %277 = vmatpush1.msra.mxu0 %v45
  %278 = vmatprep.subr.mxu0 %v42
  %279 = vmatpush1.msra.mxu0 %v41
  %280 = vmatprep.subr.mxu0 %v38
  %281 = vmatpush1.msra.mxu0 %v37
  %282 = vmatprep.subr.mxu0 %v34
  %283 = vmatpush1.msra.mxu0 %v33
  %284 = vmatprep.subr.mxu0 %v30
  %285 = vmatpush1.msra.mxu0 %v29
  %286 = vmatprep.subr.mxu0 %v26
  %287 = vmatpush1.msra.mxu0 %v25
  %288 = vmatprep.subr.mxu0 %v22
  %289 = vmatpush1.msra.mxu0 %v21
  %290 = vmatprep.subr.mxu0 %v18
  %291 = vmatpush1.msra.mxu0 %v17
  %292 = vmatprep.subr.mxu0 0.0
  %293 = vmatpush2.msra.mxu0 0.0
  %294 = vmatprep.subr.mxu0 0.0
  %295 = vmatpush2.msra.mxu0 0.0
  %296 = vmatprep.subr.mxu0 0.0
  %297 = vmatpush2.msra.mxu0 0.0
  %298 = vmatprep.subr.mxu0 0.0
  %299 = vmatpush2.msra.mxu0 0.0
  %300 = vmatprep.subr.mxu0 0.0
  %301 = vmatpush2.msra.mxu0 0.0
  %302 = vmatprep.subr.mxu0 0.0
  %303 = vmatpush2.msra.mxu0 0.0
  %304 = vmatprep.subr.mxu0 0.0
  %305 = vmatpush2.msra.mxu0 0.0
  %306 = vmatprep.subr.mxu0 0.0
  %307 = vmatpush2.msra.mxu0 0.0
  %308 = vmatprep.subr.mxu0 0.0
  %309 = vmatpush2.msra.mxu0 0.0
  %310 = vmatprep.subr.mxu0 0.0
  %311 = vmatpush2.msra.mxu0 0.0
  %312 = vmatprep.subr.mxu0 0.0
  %313 = vmatpush2.msra.mxu0 0.0
  %314 = vmatprep.subr.mxu0 0.0
  %315 = vmatpush2.msra.mxu0 0.0
  %316 = vmatprep.subr.mxu0 0.0
  %317 = vmatpush2.msra.mxu0 0.0
  %318 = vmatprep.subr.mxu0 0.0
  %319 = vmatpush2.msra.mxu0 0.0
  %320 = vmatprep.subr.mxu0 0.0
  %321 = vmatpush2.msra.mxu0 0.0
  %322 = vmatprep.subr.mxu0 0.0
  %323 = vmatpush2.msra.mxu0 0.0
  %324 = vmatprep.mubr.f32.mxu0 0.0
  %325 = vmatmul.mubr.f32.gmra.mxu0 %v254
  %v326 = vpop.f32.mrf.mxu0
  %v327 = vadd.f32 0.0, %v326
  %v328 = vpop.f32.mrf.mxu0
  %v329 = vadd.f32 0.0, %v328
  %330 = vdwg.mxu0
  %331 = vmatprep.subr.mxu0 %v80
  %332 = vmatpush1.msra.mxu0 %v79
  %333 = vmatprep.subr.mxu0 %v76
  %334 = vmatpush1.msra.mxu0 %v75
  %335 = vmatprep.subr.mxu0 %v72
  %336 = vmatpush1.msra.mxu0 %v71
  %337 = vmatprep.subr.mxu0 %v68
  %338 = vmatpush1.msra.mxu0 %v67
  %339 = vmatprep.subr.mxu0 %v64
  %340 = vmatpush1.msra.mxu0 %v63
  %341 = vmatprep.subr.mxu0 %v60
  %342 = vmatpush1.msra.mxu0 %v59
  %343 = vmatprep.subr.mxu0 %v56
  %344 = vmatpush1.msra.mxu0 %v55
  %345 = vmatprep.subr.mxu0 %v52
  %346 = vmatpush1.msra.mxu0 %v51
  %347 = vmatprep.subr.mxu0 %v48
  %348 = vmatpush1.msra.mxu0 %v47
  %349 = vmatprep.subr.mxu0 %v44
  %350 = vmatpush1.msra.mxu0 %v43
  %351 = vmatprep.subr.mxu0 %v40
  %352 = vmatpush1.msra.mxu0 %v39
  %353 = vmatprep.subr.mxu0 %v36
  %354 = vmatpush1.msra.mxu0 %v35
  %355 = vmatprep.subr.mxu0 %v32
  %356 = vmatpush1.msra.mxu0 %v31
  %357 = vmatprep.subr.mxu0 %v28
  %358 = vmatpush1.msra.mxu0 %v27
  %359 = vmatprep.subr.mxu0 %v24
  %360 = vmatpush1.msra.mxu0 %v23
  %361 = vmatprep.subr.mxu0 %v20
  %362 = vmatpush1.msra.mxu0 %v19
  %363 = vmatprep.subr.mxu0 0.0
  %364 = vmatpush2.msra.mxu0 0.0
  %365 = vmatprep.subr.mxu0 0.0
  %366 = vmatpush2.msra.mxu0 0.0
  %367 = vmatprep.subr.mxu0 0.0
  %368 = vmatpush2.msra.mxu0 0.0
  %369 = vmatprep.subr.mxu0 0.0
  %370 = vmatpush2.msra.mxu0 0.0
  %371 = vmatprep.subr.mxu0 0.0
  %372 = vmatpush2.msra.mxu0 0.0
  %373 = vmatprep.subr.mxu0 0.0
  %374 = vmatpush2.msra.mxu0 0.0
  %375 = vmatprep.subr.mxu0 0.0
  %376 = vmatpush2.msra.mxu0 0.0
  %377 = vmatprep.subr.mxu0 0.0
  %378 = vmatpush2.msra.mxu0 0.0
  %379 = vmatprep.subr.mxu0 0.0
  %380 = vmatpush2.msra.mxu0 0.0
  %381 = vmatprep.subr.mxu0 0.0
  %382 = vmatpush2.msra.mxu0 0.0
  %383 = vmatprep.subr.mxu0 0.0
  %384 = vmatpush2.msra.mxu0 0.0
  %385 = vmatprep.subr.mxu0 0.0
  %386 = vmatpush2.msra.mxu0 0.0
  %387 = vmatprep.subr.mxu0 0.0
  %388 = vmatpush2.msra.mxu0 0.0
  %389 = vmatprep.subr.mxu0 0.0
  %390 = vmatpush2.msra.mxu0 0.0
  %391 = vmatprep.subr.mxu0 0.0
  %392 = vmatpush2.msra.mxu0 0.0
  %393 = vmatprep.subr.mxu0 0.0
  %394 = vmatpush2.msra.mxu0 0.0
  %395 = vmatprep.mubr.f32.mxu0 0.0
  %396 = vmatmul.mubr.f32.gmra.mxu0 %v254
  %v397 = vpop.f32.mrf.mxu0
  %v398 = vadd.f32 0.0, %v397
  %v399 = vpop.f32.mrf.mxu0
  %v400 = vadd.f32 0.0, %v399
  %401 = vdwg.mxu0
  %v402 = vadd.f32 %v256, %v327
  %v403 = vadd.f32 %v257, %v329
  %v404 = vadd.f32 %v258, %v398
  %v405 = vadd.f32 %v259, %v400
  %v406 = vxor.u32 %v402, 2147483648
  %v407 = vmul.f32 %v406, 1.442695
  %v408 = vpow.pop %v407
  %v409 = vadd.f32 %v408, 1.0
  %v410 = vrcp.pop %v409
  %v411 = vmul.f32 1.0, %v410
  %v412 = vxor.u32 %v403, 2147483648
  %v413 = vmul.f32 %v412, 1.442695
  %v414 = vpow.pop %v413
  %v415 = vadd.f32 %v414, 1.0
  %v416 = vrcp.pop %v415
  %v417 = vmul.f32 1.0, %v416
  %v418 = vtanh.pop %v404
  %v419 = vxor.u32 %v405, 2147483648
  %v420 = vmul.f32 %v419, 1.442695
  %v421 = vpow.pop %v420
  %v422 = vadd.f32 %v421, 1.0
  %v423 = vrcp.pop %v422
  %v424 = vmul.f32 1.0, %v423
  %v425 = vmul.f32 %v417, %v252
  %v426 = vmul.f32 %v411, %v418
  %v427 = vadd.f32 %v425, %v426
  %v428 = vtanh.pop %v427
  %v429 = vmul.f32 %v424, %v428
  %s430 = scalar_lea.vmem %s0, 64
  %v431 = vld [vmem:[%s430] sm:$0xff]
  %v432 = vld [vmem:[%s430 + $0x8] sm:$0xff]
  %v433 = vld [vmem:[%s430 + $0x10] sm:$0xff]
  %v434 = vld [vmem:[%s430 + $0x18] sm:$0xff]
  %435 = vmatprep.subr.mxu0 %v78
  %436 = vmatpush1.msra.mxu0 %v77
  %437 = vmatprep.subr.mxu0 %v74
  %438 = vmatpush1.msra.mxu0 %v73
  %439 = vmatprep.subr.mxu0 %v70
  %440 = vmatpush1.msra.mxu0 %v69
  %441 = vmatprep.subr.mxu0 %v66
  %442 = vmatpush1.msra.mxu0 %v65
  %443 = vmatprep.subr.mxu0 %v62
  %444 = vmatpush1.msra.mxu0 %v61
  %445 = vmatprep.subr.mxu0 %v58
  %446 = vmatpush1.msra.mxu0 %v57
  %447 = vmatprep.subr.mxu0 %v54
  %448 = vmatpush1.msra.mxu0 %v53
  %449 = vmatprep.subr.mxu0 %v50
  %450 = vmatpush1.msra.mxu0 %v49
  %451 = vmatprep.subr.mxu0 %v46
  %452 = vmatpush1.msra.mxu0 %v45
  %453 = vmatprep.subr.mxu0 %v42
  %454 = vmatpush1.msra.mxu0 %v41
  %455 = vmatprep.subr.mxu0 %v38
  %456 = vmatpush1.msra.mxu0 %v37
  %457 = vmatprep.subr.mxu0 %v34
  %458 = vmatpush1.msra.mxu0 %v33
  %459 = vmatprep.subr.mxu0 %v30
  %460 = vmatpush1.msra.mxu0 %v29
  %461 = vmatprep.subr.mxu0 %v26
  %462 = vmatpush1.msra.mxu0 %v25
  %463 = vmatprep.subr.mxu0 %v22
  %464 = vmatpush1.msra.mxu0 %v21
  %465 = vmatprep.subr.mxu0 %v18
  %466 = vmatpush1.msra.mxu0 %v17
  %467 = vmatprep.subr.mxu0 0.0
  %468 = vmatpush2.msra.mxu0 0.0
  %469 = vmatprep.subr.mxu0 0.0
  %470 = vmatpush2.msra.mxu0 0.0
  %471 = vmatprep.subr.mxu0 0.0
  %472 = vmatpush2.msra.mxu0 0.0
  %473 = vmatprep.subr.mxu0 0.0
  %474 = vmatpush2.msra.mxu0 0.0
  %475 = vmatprep.subr.mxu0 0.0
  %476 = vmatpush2.msra.mxu0 0.0
  %477 = vmatprep.subr.mxu0 0.0
  %478 = vmatpush2.msra.mxu0 0.0
  %479 = vmatprep.subr.mxu0 0.0
  %480 = vmatpush2.msra.mxu0 0.0
  %481 = vmatprep.subr.mxu0 0.0
  %482 = vmatpush2.msra.mxu0 0.0
  %483 = vmatprep.subr.mxu0 0.0
  %484 = vmatpush2.msra.mxu0 0.0
  %485 = vmatprep.subr.mxu0 0.0
  %486 = vmatpush2.msra.mxu0 0.0
  %487 = vmatprep.subr.mxu0 0.0
  %488 = vmatpush2.msra.mxu0 0.0
  %489 = vmatprep.subr.mxu0 0.0
  %490 = vmatpush2.msra.mxu0 0.0
  %491 = vmatprep.subr.mxu0 0.0
  %492 = vmatpush2.msra.mxu0 0.0
  %493 = vmatprep.subr.mxu0 0.0
  %494 = vmatpush2.msra.mxu0 0.0
  %495 = vmatprep.subr.mxu0 0.0
  %496 = vmatpush2.msra.mxu0 0.0
  %497 = vmatprep.subr.mxu0 0.0
  %498 = vmatpush2.msra.mxu0 0.0
  %499 = vmatprep.mubr.f32.mxu0 0.0
  %500 = vmatmul.mubr.f32.gmra.mxu0 %v429
  %v501 = vpop.f32.mrf.mxu0
  %v502 = vadd.f32 0.0, %v501
  %v503 = vpop.f32.mrf.mxu0
  %v504 = vadd.f32 0.0, %v503
  %505 = vdwg.mxu0
  %506 = vmatprep.subr.mxu0 %v80
  %507 = vmatpush1.msra.mxu0 %v79
  %508 = vmatprep.subr.mxu0 %v76
  %509 = vmatpush1.msra.mxu0 %v75
  %510 = vmatprep.subr.mxu0 %v72
  %511 = vmatpush1.msra.mxu0 %v71
  %512 = vmatprep.subr.mxu0 %v68
  %513 = vmatpush1.msra.mxu0 %v67
  %514 = vmatprep.subr.mxu0 %v64
  %515 = vmatpush1.msra.mxu0 %v63
  %516 = vmatprep.subr.mxu0 %v60
  %517 = vmatpush1.msra.mxu0 %v59
  %518 = vmatprep.subr.mxu0 %v56
  %519 = vmatpush1.msra.mxu0 %v55
  %520 = vmatprep.subr.mxu0 %v52
  %521 = vmatpush1.msra.mxu0 %v51
  %522 = vmatprep.subr.mxu0 %v48
  %523 = vmatpush1.msra.mxu0 %v47
  %524 = vmatprep.subr.mxu0 %v44
  %525 = vmatpush1.msra.mxu0 %v43
  %526 = vmatprep.subr.mxu0 %v40
  %527 = vmatpush1.msra.mxu0 %v39
  %528 = vmatprep.subr.mxu0 %v36
  %529 = vmatpush1.msra.mxu0 %v35
  %530 = vmatprep.subr.mxu0 %v32
  %531 = vmatpush1.msra.mxu0 %v31
  %532 = vmatprep.subr.mxu0 %v28
  %533 = vmatpush1.msra.mxu0 %v27
  %534 = vmatprep.subr.mxu0 %v24
  %535 = vmatpush1.msra.mxu0 %v23
  %536 = vmatprep.subr.mxu0 %v20
  %537 = vmatpush1.msra.mxu0 %v19
  %538 = vmatprep.subr.mxu0 0.0
  %539 = vmatpush2.msra.mxu0 0.0
  %540 = vmatprep.subr.mxu0 0.0
  %541 = vmatpush2.msra.mxu0 0.0
  %542 = vmatprep.subr.mxu0 0.0
  %543 = vmatpush2.msra.mxu0 0.0
  %544 = vmatprep.subr.mxu0 0.0
  %545 = vmatpush2.msra.mxu0 0.0
  %546 = vmatprep.subr.mxu0 0.0
  %547 = vmatpush2.msra.mxu0 0.0
  %548 = vmatprep.subr.mxu0 0.0
  %549 = vmatpush2.msra.mxu0 0.0
  %550 = vmatprep.subr.mxu0 0.0
  %551 = vmatpush2.msra.mxu0 0.0
  %552 = vmatprep.subr.mxu0 0.0
  %553 = vmatpush2.msra.mxu0 0.0
  %554 = vmatprep.subr.mxu0 0.0
  %555 = vmatpush2.msra.mxu0 0.0
  %556 = vmatprep.subr.mxu0 0.0
  %557 = vmatpush2.msra.mxu0 0.0
  %558 = vmatprep.subr.mxu0 0.0
  %559 = vmatpush2.msra.mxu0 0.0
  %560 = vmatprep.subr.mxu0 0.0
  %561 = vmatpush2.msra.mxu0 0.0
  %562 = vmatprep.subr.mxu0 0.0
  %563 = vmatpush2.msra.mxu0 0.0
  %564 = vmatprep.subr.mxu0 0.0
  %565 = vmatpush2.msra.mxu0 0.0
  %566 = vmatprep.subr.mxu0 0.0
  %567 = vmatpush2.msra.mxu0 0.0
  %568 = vmatprep.subr.mxu0 0.0
  %569 = vmatpush2.msra.mxu0 0.0
  %570 = vmatprep.mubr.f32.mxu0 0.0
  %571 = vmatmul.mubr.f32.gmra.mxu0 %v429
  %v572 = vpop.f32.mrf.mxu0
  %v573 = vadd.f32 0.0, %v572
  %v574 = vpop.f32.mrf.mxu0
  %v575 = vadd.f32 0.0, %v574
  %576 = vdwg.mxu0
  %v577 = vadd.f32 %v431, %v502
  %v578 = vadd.f32 %v432, %v504
  %v579 = vadd.f32 %v433, %v573
  %v580 = vadd.f32 %v434, %v575
  %v581 = vxor.u32 %v577, 2147483648
  %v582 = vmul.f32 %v581, 1.442695
  %v583 = vpow.pop %v582
  %v584 = vadd.f32 %v583, 1.0
  %v585 = vrcp.pop %v584
  %v586 = vmul.f32 1.0, %v585
  %v587 = vxor.u32 %v578, 2147483648
  %v588 = vmul.f32 %v587, 1.442695
  %v589 = vpow.pop %v588
  %v590 = vadd.f32 %v589, 1.0
  %v591 = vrcp.pop %v590
  %v592 = vmul.f32 1.0, %v591
  %v593 = vtanh.pop %v579
  %v594 = vxor.u32 %v580, 2147483648
  %v595 = vmul.f32 %v594, 1.442695
  %v596 = vpow.pop %v595
  %v597 = vadd.f32 %v596, 1.0
  %v598 = vrcp.pop %v597
  %v599 = vmul.f32 1.0, %v598
  %v600 = vmul.f32 %v592, %v427
  %v601 = vmul.f32 %v586, %v593
  %v602 = vadd.f32 %v600, %v601
  %v603 = vtanh.pop %v602
  %v604 = vmul.f32 %v599, %v603
  %s605 = scalar_lea.vmem %s0, 96
  %v606 = vld [vmem:[%s605] sm:$0xff]
  %v607 = vld [vmem:[%s605 + $0x8] sm:$0xff]
  %v608 = vld [vmem:[%s605 + $0x10] sm:$0xff]
  %v609 = vld [vmem:[%s605 + $0x18] sm:$0xff]
  %610 = vmatprep.subr.mxu0 %v78
  %611 = vmatpush1.msra.mxu0 %v77
  %612 = vmatprep.subr.mxu0 %v74
  %613 = vmatpush1.msra.mxu0 %v73
  %614 = vmatprep.subr.mxu0 %v70
  %615 = vmatpush1.msra.mxu0 %v69
  %616 = vmatprep.subr.mxu0 %v66
  %617 = vmatpush1.msra.mxu0 %v65
  %618 = vmatprep.subr.mxu0 %v62
  %619 = vmatpush1.msra.mxu0 %v61
  %620 = vmatprep.subr.mxu0 %v58
  %621 = vmatpush1.msra.mxu0 %v57
  %622 = vmatprep.subr.mxu0 %v54
  %623 = vmatpush1.msra.mxu0 %v53
  %624 = vmatprep.subr.mxu0 %v50
  %625 = vmatpush1.msra.mxu0 %v49
  %626 = vmatprep.subr.mxu0 %v46
  %627 = vmatpush1.msra.mxu0 %v45
  %628 = vmatprep.subr.mxu0 %v42
  %629 = vmatpush1.msra.mxu0 %v41
  %630 = vmatprep.subr.mxu0 %v38
  %631 = vmatpush1.msra.mxu0 %v37
  %632 = vmatprep.subr.mxu0 %v34
  %633 = vmatpush1.msra.mxu0 %v33
  %634 = vmatprep.subr.mxu0 %v30
  %635 = vmatpush1.msra.mxu0 %v29
  %636 = vmatprep.subr.mxu0 %v26
  %637 = vmatpush1.msra.mxu0 %v25
  %638 = vmatprep.subr.mxu0 %v22
  %639 = vmatpush1.msra.mxu0 %v21
  %640 = vmatprep.subr.mxu0 %v18
  %641 = vmatpush1.msra.mxu0 %v17
  %642 = vmatprep.subr.mxu0 0.0
  %643 = vmatpush2.msra.mxu0 0.0
  %644 = vmatprep.subr.mxu0 0.0
  %645 = vmatpush2.msra.mxu0 0.0
  %646 = vmatprep.subr.mxu0 0.0
  %647 = vmatpush2.msra.mxu0 0.0
  %648 = vmatprep.subr.mxu0 0.0
  %649 = vmatpush2.msra.mxu0 0.0
  %650 = vmatprep.subr.mxu0 0.0
  %651 = vmatpush2.msra.mxu0 0.0
  %652 = vmatprep.subr.mxu0 0.0
  %653 = vmatpush2.msra.mxu0 0.0
  %654 = vmatprep.subr.mxu0 0.0
  %655 = vmatpush2.msra.mxu0 0.0
  %656 = vmatprep.subr.mxu0 0.0
  %657 = vmatpush2.msra.mxu0 0.0
  %658 = vmatprep.subr.mxu0 0.0
  %659 = vmatpush2.msra.mxu0 0.0
  %660 = vmatprep.subr.mxu0 0.0
  %661 = vmatpush2.msra.mxu0 0.0
  %662 = vmatprep.subr.mxu0 0.0
  %663 = vmatpush2.msra.mxu0 0.0
  %664 = vmatprep.subr.mxu0 0.0
  %665 = vmatpush2.msra.mxu0 0.0
  %666 = vmatprep.subr.mxu0 0.0
  %667 = vmatpush2.msra.mxu0 0.0
  %668 = vmatprep.subr.mxu0 0.0
  %669 = vmatpush2.msra.mxu0 0.0
  %670 = vmatprep.subr.mxu0 0.0
  %671 = vmatpush2.msra.mxu0 0.0
  %672 = vmatprep.subr.mxu0 0.0
  %673 = vmatpush2.msra.mxu0 0.0
  %674 = vmatprep.mubr.f32.mxu0 0.0
  %675 = vmatmul.mubr.f32.gmra.mxu0 %v604
  %v676 = vpop.f32.mrf.mxu0
  %v677 = vadd.f32 0.0, %v676
  %v678 = vpop.f32.mrf.mxu0
  %v679 = vadd.f32 0.0, %v678
  %680 = vdwg.mxu0
  %681 = vmatprep.subr.mxu0 %v80
  %682 = vmatpush1.msra.mxu0 %v79
  %683 = vmatprep.subr.mxu0 %v76
  %684 = vmatpush1.msra.mxu0 %v75
  %685 = vmatprep.subr.mxu0 %v72
  %686 = vmatpush1.msra.mxu0 %v71
  %687 = vmatprep.subr.mxu0 %v68
  %688 = vmatpush1.msra.mxu0 %v67
  %689 = vmatprep.subr.mxu0 %v64
  %690 = vmatpush1.msra.mxu0 %v63
  %691 = vmatprep.subr.mxu0 %v60
  %692 = vmatpush1.msra.mxu0 %v59
  %693 = vmatprep.subr.mxu0 %v56
  %694 = vmatpush1.msra.mxu0 %v55
  %695 = vmatprep.subr.mxu0 %v52
  %696 = vmatpush1.msra.mxu0 %v51
  %697 = vmatprep.subr.mxu0 %v48
  %698 = vmatpush1.msra.mxu0 %v47
  %699 = vmatprep.subr.mxu0 %v44
  %700 = vmatpush1.msra.mxu0 %v43
  %701 = vmatprep.subr.mxu0 %v40
  %702 = vmatpush1.msra.mxu0 %v39
  %703 = vmatprep.subr.mxu0 %v36
  %704 = vmatpush1.msra.mxu0 %v35
  %705 = vmatprep.subr.mxu0 %v32
  %706 = vmatpush1.msra.mxu0 %v31
  %707 = vmatprep.subr.mxu0 %v28
  %708 = vmatpush1.msra.mxu0 %v27
  %709 = vmatprep.subr.mxu0 %v24
  %710 = vmatpush1.msra.mxu0 %v23
  %711 = vmatprep.subr.mxu0 %v20
  %712 = vmatpush1.msra.mxu0 %v19
  %713 = vmatprep.subr.mxu0 0.0
  %714 = vmatpush2.msra.mxu0 0.0
  %715 = vmatprep.subr.mxu0 0.0
  %716 = vmatpush2.msra.mxu0 0.0
  %717 = vmatprep.subr.mxu0 0.0
  %718 = vmatpush2.msra.mxu0 0.0
  %719 = vmatprep.subr.mxu0 0.0
  %720 = vmatpush2.msra.mxu0 0.0
  %721 = vmatprep.subr.mxu0 0.0
  %722 = vmatpush2.msra.mxu0 0.0
  %723 = vmatprep.subr.mxu0 0.0
  %724 = vmatpush2.msra.mxu0 0.0
  %725 = vmatprep.subr.mxu0 0.0
  %726 = vmatpush2.msra.mxu0 0.0
  %727 = vmatprep.subr.mxu0 0.0
  %728 = vmatpush2.msra.mxu0 0.0
  %729 = vmatprep.subr.mxu0 0.0
  %730 = vmatpush2.msra.mxu0 0.0
  %731 = vmatprep.subr.mxu0 0.0
  %732 = vmatpush2.msra.mxu0 0.0
  %733 = vmatprep.subr.mxu0 0.0
  %734 = vmatpush2.msra.mxu0 0.0
  %735 = vmatprep.subr.mxu0 0.0
  %736 = vmatpush2.msra.mxu0 0.0
  %737 = vmatprep.subr.mxu0 0.0
  %738 = vmatpush2.msra.mxu0 0.0
  %739 = vmatprep.subr.mxu0 0.0
  %740 = vmatpush2.msra.mxu0 0.0
  %741 = vmatprep.subr.mxu0 0.0
  %742 = vmatpush2.msra.mxu0 0.0
  %743 = vmatprep.subr.mxu0 0.0
  %744 = vmatpush2.msra.mxu0 0.0
  %745 = vmatprep.mubr.f32.mxu0 0.0
  %746 = vmatmul.mubr.f32.gmra.mxu0 %v604
  %v747 = vpop.f32.mrf.mxu0
  %v748 = vadd.f32 0.0, %v747
  %v749 = vpop.f32.mrf.mxu0
  %v750 = vadd.f32 0.0, %v749
  %751 = vdwg.mxu0
  %v752 = vadd.f32 %v606, %v677
  %v753 = vadd.f32 %v607, %v679
  %v754 = vadd.f32 %v608, %v748
  %v755 = vadd.f32 %v609, %v750
  %v756 = vxor.u32 %v752, 2147483648
  %v757 = vmul.f32 %v756, 1.442695
  %v758 = vpow.pop %v757
  %v759 = vadd.f32 %v758, 1.0
  %v760 = vrcp.pop %v759
  %v761 = vmul.f32 1.0, %v760
  %v762 = vxor.u32 %v753, 2147483648
  %v763 = vmul.f32 %v762, 1.442695
  %v764 = vpow.pop %v763
  %v765 = vadd.f32 %v764, 1.0
  %v766 = vrcp.pop %v765
  %v767 = vmul.f32 1.0, %v766
  %v768 = vtanh.pop %v754
  %v769 = vxor.u32 %v755, 2147483648
  %v770 = vmul.f32 %v769, 1.442695
  %v771 = vpow.pop %v770
  %v772 = vadd.f32 %v771, 1.0
  %v773 = vrcp.pop %v772
  %v774 = vmul.f32 1.0, %v773
  %v775 = vmul.f32 %v767, %v602
  %v776 = vmul.f32 %v761, %v768
  %v777 = vadd.f32 %v775, %v776
  %v778 = vtanh.pop %v777
  %v779 = vmul.f32 %v774, %v778
  %s780 = scalar_lea.vmem %s0, 128
  %v781 = vld [vmem:[%s780] sm:$0xff]
  %v782 = vld [vmem:[%s780 + $0x8] sm:$0xff]
  %v783 = vld [vmem:[%s780 + $0x10] sm:$0xff]
  %v784 = vld [vmem:[%s780 + $0x18] sm:$0xff]
  %785 = vmatprep.subr.mxu0 %v78
  %786 = vmatpush1.msra.mxu0 %v77
  %787 = vmatprep.subr.mxu0 %v74
  %788 = vmatpush1.msra.mxu0 %v73
  %789 = vmatprep.subr.mxu0 %v70
  %790 = vmatpush1.msra.mxu0 %v69
  %791 = vmatprep.subr.mxu0 %v66
  %792 = vmatpush1.msra.mxu0 %v65
  %793 = vmatprep.subr.mxu0 %v62
  %794 = vmatpush1.msra.mxu0 %v61
  %795 = vmatprep.subr.mxu0 %v58
  %796 = vmatpush1.msra.mxu0 %v57
  %797 = vmatprep.subr.mxu0 %v54
  %798 = vmatpush1.msra.mxu0 %v53
  %799 = vmatprep.subr.mxu0 %v50
  %800 = vmatpush1.msra.mxu0 %v49
  %801 = vmatprep.subr.mxu0 %v46
  %802 = vmatpush1.msra.mxu0 %v45
  %803 = vmatprep.subr.mxu0 %v42
  %804 = vmatpush1.msra.mxu0 %v41
  %805 = vmatprep.subr.mxu0 %v38
  %806 = vmatpush1.msra.mxu0 %v37
  %807 = vmatprep.subr.mxu0 %v34
  %808 = vmatpush1.msra.mxu0 %v33
  %809 = vmatprep.subr.mxu0 %v30
  %810 = vmatpush1.msra.mxu0 %v29
  %811 = vmatprep.subr.mxu0 %v26
  %812 = vmatpush1.msra.mxu0 %v25
  %813 = vmatprep.subr.mxu0 %v22
  %814 = vmatpush1.msra.mxu0 %v21
  %815 = vmatprep.subr.mxu0 %v18
  %816 = vmatpush1.msra.mxu0 %v17
  %817 = vmatprep.subr.mxu0 0.0
  %818 = vmatpush2.msra.mxu0 0.0
  %819 = vmatprep.subr.mxu0 0.0
  %820 = vmatpush2.msra.mxu0 0.0
  %821 = vmatprep.subr.mxu0 0.0
  %822 = vmatpush2.msra.mxu0 0.0
  %823 = vmatprep.subr.mxu0 0.0
  %824 = vmatpush2.msra.mxu0 0.0
  %825 = vmatprep.subr.mxu0 0.0
  %826 = vmatpush2.msra.mxu0 0.0
  %827 = vmatprep.subr.mxu0 0.0
  %828 = vmatpush2.msra.mxu0 0.0
  %829 = vmatprep.subr.mxu0 0.0
  %830 = vmatpush2.msra.mxu0 0.0
  %831 = vmatprep.subr.mxu0 0.0
  %832 = vmatpush2.msra.mxu0 0.0
  %833 = vmatprep.subr.mxu0 0.0
  %834 = vmatpush2.msra.mxu0 0.0
  %835 = vmatprep.subr.mxu0 0.0
  %836 = vmatpush2.msra.mxu0 0.0
  %837 = vmatprep.subr.mxu0 0.0
  %838 = vmatpush2.msra.mxu0 0.0
  %839 = vmatprep.subr.mxu0 0.0
  %840 = vmatpush2.msra.mxu0 0.0
  %841 = vmatprep.subr.mxu0 0.0
  %842 = vmatpush2.msra.mxu0 0.0
  %843 = vmatprep.subr.mxu0 0.0
  %844 = vmatpush2.msra.mxu0 0.0
  %845 = vmatprep.subr.mxu0 0.0
  %846 = vmatpush2.msra.mxu0 0.0
  %847 = vmatprep.subr.mxu0 0.0
  %848 = vmatpush2.msra.mxu0 0.0
  %849 = vmatprep.mubr.f32.mxu0 0.0
  %850 = vmatmul.mubr.f32.gmra.mxu0 %v779
  %v851 = vpop.f32.mrf.mxu0
  %v852 = vadd.f32 0.0, %v851
  %v853 = vpop.f32.mrf.mxu0
  %v854 = vadd.f32 0.0, %v853
  %855 = vdwg.mxu0
  %856 = vmatprep.subr.mxu0 %v80
  %857 = vmatpush1.msra.mxu0 %v79
  %858 = vmatprep.subr.mxu0 %v76
  %859 = vmatpush1.msra.mxu0 %v75
  %860 = vmatprep.subr.mxu0 %v72
  %861 = vmatpush1.msra.mxu0 %v71
  %862 = vmatprep.subr.mxu0 %v68
  %863 = vmatpush1.msra.mxu0 %v67
  %864 = vmatprep.subr.mxu0 %v64
  %865 = vmatpush1.msra.mxu0 %v63
  %866 = vmatprep.subr.mxu0 %v60
  %867 = vmatpush1.msra.mxu0 %v59
  %868 = vmatprep.subr.mxu0 %v56
  %869 = vmatpush1.msra.mxu0 %v55
  %870 = vmatprep.subr.mxu0 %v52
  %871 = vmatpush1.msra.mxu0 %v51
  %872 = vmatprep.subr.mxu0 %v48
  %873 = vmatpush1.msra.mxu0 %v47
  %874 = vmatprep.subr.mxu0 %v44
  %875 = vmatpush1.msra.mxu0 %v43
  %876 = vmatprep.subr.mxu0 %v40
  %877 = vmatpush1.msra.mxu0 %v39
  %878 = vmatprep.subr.mxu0 %v36
  %879 = vmatpush1.msra.mxu0 %v35
  %880 = vmatprep.subr.mxu0 %v32
  %881 = vmatpush1.msra.mxu0 %v31
  %882 = vmatprep.subr.mxu0 %v28
  %883 = vmatpush1.msra.mxu0 %v27
  %884 = vmatprep.subr.mxu0 %v24
  %885 = vmatpush1.msra.mxu0 %v23
  %886 = vmatprep.subr.mxu0 %v20
  %887 = vmatpush1.msra.mxu0 %v19
  %888 = vmatprep.subr.mxu0 0.0
  %889 = vmatpush2.msra.mxu0 0.0
  %890 = vmatprep.subr.mxu0 0.0
  %891 = vmatpush2.msra.mxu0 0.0
  %892 = vmatprep.subr.mxu0 0.0
  %893 = vmatpush2.msra.mxu0 0.0
  %894 = vmatprep.subr.mxu0 0.0
  %895 = vmatpush2.msra.mxu0 0.0
  %896 = vmatprep.subr.mxu0 0.0
  %897 = vmatpush2.msra.mxu0 0.0
  %898 = vmatprep.subr.mxu0 0.0
  %899 = vmatpush2.msra.mxu0 0.0
  %900 = vmatprep.subr.mxu0 0.0
  %901 = vmatpush2.msra.mxu0 0.0
  %902 = vmatprep.subr.mxu0 0.0
  %903 = vmatpush2.msra.mxu0 0.0
  %904 = vmatprep.subr.mxu0 0.0
  %905 = vmatpush2.msra.mxu0 0.0
  %906 = vmatprep.subr.mxu0 0.0
  %907 = vmatpush2.msra.mxu0 0.0
  %908 = vmatprep.subr.mxu0 0.0
  %909 = vmatpush2.msra.mxu0 0.0
  %910 = vmatprep.subr.mxu0 0.0
  %911 = vmatpush2.msra.mxu0 0.0
  %912 = vmatprep.subr.mxu0 0.0
  %913 = vmatpush2.msra.mxu0 0.0
  %914 = vmatprep.subr.mxu0 0.0
  %915 = vmatpush2.msra.mxu0 0.0
  %916 = vmatprep.subr.mxu0 0.0
  %917 = vmatpush2.msra.mxu0 0.0
  %918 = vmatprep.subr.mxu0 0.0
  %919 = vmatpush2.msra.mxu0 0.0
  %920 = vmatprep.mubr.f32.mxu0 0.0
  %921 = vmatmul.mubr.f32.gmra.mxu0 %v779
  %v922 = vpop.f32.mrf.mxu0
  %v923 = vadd.f32 0.0, %v922
  %v924 = vpop.f32.mrf.mxu0
  %v925 = vadd.f32 0.0, %v924
  %926 = vdwg.mxu0
  %v927 = vadd.f32 %v781, %v852
  %v928 = vadd.f32 %v782, %v854
  %v929 = vadd.f32 %v783, %v923
  %v930 = vadd.f32 %v784, %v925
  %v931 = vxor.u32 %v927, 2147483648
  %v932 = vmul.f32 %v931, 1.442695
  %v933 = vpow.pop %v932
  %v934 = vadd.f32 %v933, 1.0
  %v935 = vrcp.pop %v934
  %v936 = vmul.f32 1.0, %v935
  %v937 = vxor.u32 %v928, 2147483648
  %v938 = vmul.f32 %v937, 1.442695
  %v939 = vpow.pop %v938
  %v940 = vadd.f32 %v939, 1.0
  %v941 = vrcp.pop %v940
  %v942 = vmul.f32 1.0, %v941
  %v943 = vtanh.pop %v929
  %v944 = vxor.u32 %v930, 2147483648
  %v945 = vmul.f32 %v944, 1.442695
  %v946 = vpow.pop %v945
  %v947 = vadd.f32 %v946, 1.0
  %v948 = vrcp.pop %v947
  %v949 = vmul.f32 1.0, %v948
  %v950 = vmul.f32 %v942, %v777
  %v951 = vmul.f32 %v936, %v943
  %v952 = vadd.f32 %v950, %v951
  %v953 = vtanh.pop %v952
  %v954 = vmul.f32 %v949, %v953
  %s955 = scalar_lea.vmem %s0, 160
  %v956 = vld [vmem:[%s955] sm:$0xff]
  %v957 = vld [vmem:[%s955 + $0x8] sm:$0xff]
  %v958 = vld [vmem:[%s955 + $0x10] sm:$0xff]
  %v959 = vld [vmem:[%s955 + $0x18] sm:$0xff]
  %960 = vmatprep.subr.mxu0 %v78
  %961 = vmatpush1.msra.mxu0 %v77
  %962 = vmatprep.subr.mxu0 %v74
  %963 = vmatpush1.msra.mxu0 %v73
  %964 = vmatprep.subr.mxu0 %v70
  %965 = vmatpush1.msra.mxu0 %v69
  %966 = vmatprep.subr.mxu0 %v66
  %967 = vmatpush1.msra.mxu0 %v65
  %968 = vmatprep.subr.mxu0 %v62
  %969 = vmatpush1.msra.mxu0 %v61
  %970 = vmatprep.subr.mxu0 %v58
  %971 = vmatpush1.msra.mxu0 %v57
  %972 = vmatprep.subr.mxu0 %v54
  %973 = vmatpush1.msra.mxu0 %v53
  %974 = vmatprep.subr.mxu0 %v50
  %975 = vmatpush1.msra.mxu0 %v49
  %976 = vmatprep.subr.mxu0 %v46
  %977 = vmatpush1.msra.mxu0 %v45
  %978 = vmatprep.subr.mxu0 %v42
  %979 = vmatpush1.msra.mxu0 %v41
  %980 = vmatprep.subr.mxu0 %v38
  %981 = vmatpush1.msra.mxu0 %v37
  %982 = vmatprep.subr.mxu0 %v34
  %983 = vmatpush1.msra.mxu0 %v33
  %984 = vmatprep.subr.mxu0 %v30
  %985 = vmatpush1.msra.mxu0 %v29
  %986 = vmatprep.subr.mxu0 %v26
  %987 = vmatpush1.msra.mxu0 %v25
  %988 = vmatprep.subr.mxu0 %v22
  %989 = vmatpush1.msra.mxu0 %v21
  %990 = vmatprep.subr.mxu0 %v18
  %991 = vmatpush1.msra.mxu0 %v17
  %992 = vmatprep.subr.mxu0 0.0
  %993 = vmatpush2.msra.mxu0 0.0
  %994 = vmatprep.subr.mxu0 0.0
  %995 = vmatpush2.msra.mxu0 0.0
  %996 = vmatprep.subr.mxu0 0.0
  %997 = vmatpush2.msra.mxu0 0.0
  %998 = vmatprep.subr.mxu0 0.0
  %999 = vmatpush2.msra.mxu0 0.0
  %1000 = vmatprep.subr.mxu0 0.0
  %1001 = vmatpush2.msra.mxu0 0.0
  %1002 = vmatprep.subr.mxu0 0.0
  %1003 = vmatpush2.msra.mxu0 0.0
  %1004 = vmatprep.subr.mxu0 0.0
  %1005 = vmatpush2.msra.mxu0 0.0
  %1006 = vmatprep.subr.mxu0 0.0
  %1007 = vmatpush2.msra.mxu0 0.0
  %1008 = vmatprep.subr.mxu0 0.0
  %1009 = vmatpush2.msra.mxu0 0.0
  %1010 = vmatprep.subr.mxu0 0.0
  %1011 = vmatpush2.msra.mxu0 0.0
  %1012 = vmatprep.subr.mxu0 0.0
  %1013 = vmatpush2.msra.mxu0 0.0
  %1014 = vmatprep.subr.mxu0 0.0
  %1015 = vmatpush2.msra.mxu0 0.0
  %1016 = vmatprep.subr.mxu0 0.0
  %1017 = vmatpush2.msra.mxu0 0.0
  %1018 = vmatprep.subr.mxu0 0.0
  %1019 = vmatpush2.msra.mxu0 0.0
  %1020 = vmatprep.subr.mxu0 0.0
  %1021 = vmatpush2.msra.mxu0 0.0
  %1022 = vmatprep.subr.mxu0 0.0
  %1023 = vmatpush2.msra.mxu0 0.0
  %1024 = vmatprep.mubr.f32.mxu0 0.0
  %1025 = vmatmul.mubr.f32.gmra.mxu0 %v954
  %v1026 = vpop.f32.mrf.mxu0
  %v1027 = vadd.f32 0.0, %v1026
  %v1028 = vpop.f32.mrf.mxu0
  %v1029 = vadd.f32 0.0, %v1028
  %1030 = vdwg.mxu0
  %1031 = vmatprep.subr.mxu0 %v80
  %1032 = vmatpush1.msra.mxu0 %v79
  %1033 = vmatprep.subr.mxu0 %v76
  %1034 = vmatpush1.msra.mxu0 %v75
  %1035 = vmatprep.subr.mxu0 %v72
  %1036 = vmatpush1.msra.mxu0 %v71
  %1037 = vmatprep.subr.mxu0 %v68
  %1038 = vmatpush1.msra.mxu0 %v67
  %1039 = vmatprep.subr.mxu0 %v64
  %1040 = vmatpush1.msra.mxu0 %v63
  %1041 = vmatprep.subr.mxu0 %v60
  %1042 = vmatpush1.msra.mxu0 %v59
  %1043 = vmatprep.subr.mxu0 %v56
  %1044 = vmatpush1.msra.mxu0 %v55
  %1045 = vmatprep.subr.mxu0 %v52
  %1046 = vmatpush1.msra.mxu0 %v51
  %1047 = vmatprep.subr.mxu0 %v48
  %1048 = vmatpush1.msra.mxu0 %v47
  %1049 = vmatprep.subr.mxu0 %v44
  %1050 = vmatpush1.msra.mxu0 %v43
  %1051 = vmatprep.subr.mxu0 %v40
  %1052 = vmatpush1.msra.mxu0 %v39
  %1053 = vmatprep.subr.mxu0 %v36
  %1054 = vmatpush1.msra.mxu0 %v35
  %1055 = vmatprep.subr.mxu0 %v32
  %1056 = vmatpush1.msra.mxu0 %v31
  %1057 = vmatprep.subr.mxu0 %v28
  %1058 = vmatpush1.msra.mxu0 %v27
  %1059 = vmatprep.subr.mxu0 %v24
  %1060 = vmatpush1.msra.mxu0 %v23
  %1061 = vmatprep.subr.mxu0 %v20
  %1062 = vmatpush1.msra.mxu0 %v19
  %1063 = vmatprep.subr.mxu0 0.0
  %1064 = vmatpush2.msra.mxu0 0.0
  %1065 = vmatprep.subr.mxu0 0.0
  %1066 = vmatpush2.msra.mxu0 0.0
  %1067 = vmatprep.subr.mxu0 0.0
  %1068 = vmatpush2.msra.mxu0 0.0
  %1069 = vmatprep.subr.mxu0 0.0
  %1070 = vmatpush2.msra.mxu0 0.0
  %1071 = vmatprep.subr.mxu0 0.0
  %1072 = vmatpush2.msra.mxu0 0.0
  %1073 = vmatprep.subr.mxu0 0.0
  %1074 = vmatpush2.msra.mxu0 0.0
  %1075 = vmatprep.subr.mxu0 0.0
  %1076 = vmatpush2.msra.mxu0 0.0
  %1077 = vmatprep.subr.mxu0 0.0
  %1078 = vmatpush2.msra.mxu0 0.0
  %1079 = vmatprep.subr.mxu0 0.0
  %1080 = vmatpush2.msra.mxu0 0.0
  %1081 = vmatprep.subr.mxu0 0.0
  %1082 = vmatpush2.msra.mxu0 0.0
  %1083 = vmatprep.subr.mxu0 0.0
  %1084 = vmatpush2.msra.mxu0 0.0
  %1085 = vmatprep.subr.mxu0 0.0
  %1086 = vmatpush2.msra.mxu0 0.0
  %1087 = vmatprep.subr.mxu0 0.0
  %1088 = vmatpush2.msra.mxu0 0.0
  %1089 = vmatprep.subr.mxu0 0.0
  %1090 = vmatpush2.msra.mxu0 0.0
  %1091 = vmatprep.subr.mxu0 0.0
  %1092 = vmatpush2.msra.mxu0 0.0
  %1093 = vmatprep.subr.mxu0 0.0
  %1094 = vmatpush2.msra.mxu0 0.0
  %1095 = vmatprep.mubr.f32.mxu0 0.0
  %1096 = vmatmul.mubr.f32.gmra.mxu0 %v954
  %v1097 = vpop.f32.mrf.mxu0
  %v1098 = vadd.f32 0.0, %v1097
  %v1099 = vpop.f32.mrf.mxu0
  %v1100 = vadd.f32 0.0, %v1099
  %1101 = vdwg.mxu0
  %v1102 = vadd.f32 %v956, %v1027
  %v1103 = vadd.f32 %v957, %v1029
  %v1104 = vadd.f32 %v958, %v1098
  %v1105 = vadd.f32 %v959, %v1100
  %v1106 = vxor.u32 %v1102, 2147483648
  %v1107 = vmul.f32 %v1106, 1.442695
  %v1108 = vpow.pop %v1107
  %v1109 = vadd.f32 %v1108, 1.0
  %v1110 = vrcp.pop %v1109
  %v1111 = vmul.f32 1.0, %v1110
  %v1112 = vxor.u32 %v1103, 2147483648
  %v1113 = vmul.f32 %v1112, 1.442695
  %v1114 = vpow.pop %v1113
  %v1115 = vadd.f32 %v1114, 1.0
  %v1116 = vrcp.pop %v1115
  %v1117 = vmul.f32 1.0, %v1116
  %v1118 = vtanh.pop %v1104
  %v1119 = vxor.u32 %v1105, 2147483648
  %v1120 = vmul.f32 %v1119, 1.442695
  %v1121 = vpow.pop %v1120
  %v1122 = vadd.f32 %v1121, 1.0
  %v1123 = vrcp.pop %v1122
  %v1124 = vmul.f32 1.0, %v1123
  %v1125 = vmul.f32 %v1117, %v952
  %v1126 = vmul.f32 %v1111, %v1118
  %v1127 = vadd.f32 %v1125, %v1126
  %v1128 = vtanh.pop %v1127
  %v1129 = vmul.f32 %v1124, %v1128
  %s1130 = scalar_lea.vmem %s0, 192
  %v1131 = vld [vmem:[%s1130] sm:$0xff]
  %v1132 = vld [vmem:[%s1130 + $0x8] sm:$0xff]
  %v1133 = vld [vmem:[%s1130 + $0x10] sm:$0xff]
  %v1134 = vld [vmem:[%s1130 + $0x18] sm:$0xff]
  %1135 = vmatprep.subr.mxu0 %v78
  %1136 = vmatpush1.msra.mxu0 %v77
  %1137 = vmatprep.subr.mxu0 %v74
  %1138 = vmatpush1.msra.mxu0 %v73
  %1139 = vmatprep.subr.mxu0 %v70
  %1140 = vmatpush1.msra.mxu0 %v69
  %1141 = vmatprep.subr.mxu0 %v66
  %1142 = vmatpush1.msra.mxu0 %v65
  %1143 = vmatprep.subr.mxu0 %v62
  %1144 = vmatpush1.msra.mxu0 %v61
  %1145 = vmatprep.subr.mxu0 %v58
  %1146 = vmatpush1.msra.mxu0 %v57
  %1147 = vmatprep.subr.mxu0 %v54
  %1148 = vmatpush1.msra.mxu0 %v53
  %1149 = vmatprep.subr.mxu0 %v50
  %1150 = vmatpush1.msra.mxu0 %v49
  %1151 = vmatprep.subr.mxu0 %v46
  %1152 = vmatpush1.msra.mxu0 %v45
  %1153 = vmatprep.subr.mxu0 %v42
  %1154 = vmatpush1.msra.mxu0 %v41
  %1155 = vmatprep.subr.mxu0 %v38
  %1156 = vmatpush1.msra.mxu0 %v37
  %1157 = vmatprep.subr.mxu0 %v34
  %1158 = vmatpush1.msra.mxu0 %v33
  %1159 = vmatprep.subr.mxu0 %v30
  %1160 = vmatpush1.msra.mxu0 %v29
  %1161 = vmatprep.subr.mxu0 %v26
  %1162 = vmatpush1.msra.mxu0 %v25
  %1163 = vmatprep.subr.mxu0 %v22
  %1164 = vmatpush1.msra.mxu0 %v21
  %1165 = vmatprep.subr.mxu0 %v18
  %1166 = vmatpush1.msra.mxu0 %v17
  %1167 = vmatprep.subr.mxu0 0.0
  %1168 = vmatpush2.msra.mxu0 0.0
  %1169 = vmatprep.subr.mxu0 0.0
  %1170 = vmatpush2.msra.mxu0 0.0
  %1171 = vmatprep.subr.mxu0 0.0
  %1172 = vmatpush2.msra.mxu0 0.0
  %1173 = vmatprep.subr.mxu0 0.0
  %1174 = vmatpush2.msra.mxu0 0.0
  %1175 = vmatprep.subr.mxu0 0.0
  %1176 = vmatpush2.msra.mxu0 0.0
  %1177 = vmatprep.subr.mxu0 0.0
  %1178 = vmatpush2.msra.mxu0 0.0
  %1179 = vmatprep.subr.mxu0 0.0
  %1180 = vmatpush2.msra.mxu0 0.0
  %1181 = vmatprep.subr.mxu0 0.0
  %1182 = vmatpush2.msra.mxu0 0.0
  %1183 = vmatprep.subr.mxu0 0.0
  %1184 = vmatpush2.msra.mxu0 0.0
  %1185 = vmatprep.subr.mxu0 0.0
  %1186 = vmatpush2.msra.mxu0 0.0
  %1187 = vmatprep.subr.mxu0 0.0
  %1188 = vmatpush2.msra.mxu0 0.0
  %1189 = vmatprep.subr.mxu0 0.0
  %1190 = vmatpush2.msra.mxu0 0.0
  %1191 = vmatprep.subr.mxu0 0.0
  %1192 = vmatpush2.msra.mxu0 0.0
  %1193 = vmatprep.subr.mxu0 0.0
  %1194 = vmatpush2.msra.mxu0 0.0
  %1195 = vmatprep.subr.mxu0 0.0
  %1196 = vmatpush2.msra.mxu0 0.0
  %1197 = vmatprep.subr.mxu0 0.0
  %1198 = vmatpush2.msra.mxu0 0.0
  %1199 = vmatprep.mubr.f32.mxu0 0.0
  %1200 = vmatmul.mubr.f32.gmra.mxu0 %v1129
  %v1201 = vpop.f32.mrf.mxu0
  %v1202 = vadd.f32 0.0, %v1201
  %v1203 = vpop.f32.mrf.mxu0
  %v1204 = vadd.f32 0.0, %v1203
  %1205 = vdwg.mxu0
  %1206 = vmatprep.subr.mxu0 %v80
  %1207 = vmatpush1.msra.mxu0 %v79
  %1208 = vmatprep.subr.mxu0 %v76
  %1209 = vmatpush1.msra.mxu0 %v75
  %1210 = vmatprep.subr.mxu0 %v72
  %1211 = vmatpush1.msra.mxu0 %v71
  %1212 = vmatprep.subr.mxu0 %v68
  %1213 = vmatpush1.msra.mxu0 %v67
  %1214 = vmatprep.subr.mxu0 %v64
  %1215 = vmatpush1.msra.mxu0 %v63
  %1216 = vmatprep.subr.mxu0 %v60
  %1217 = vmatpush1.msra.mxu0 %v59
  %1218 = vmatprep.subr.mxu0 %v56
  %1219 = vmatpush1.msra.mxu0 %v55
  %1220 = vmatprep.subr.mxu0 %v52
  %1221 = vmatpush1.msra.mxu0 %v51
  %1222 = vmatprep.subr.mxu0 %v48
  %1223 = vmatpush1.msra.mxu0 %v47
  %1224 = vmatprep.subr.mxu0 %v44
  %1225 = vmatpush1.msra.mxu0 %v43
  %1226 = vmatprep.subr.mxu0 %v40
  %1227 = vmatpush1.msra.mxu0 %v39
  %1228 = vmatprep.subr.mxu0 %v36
  %1229 = vmatpush1.msra.mxu0 %v35
  %1230 = vmatprep.subr.mxu0 %v32
  %1231 = vmatpush1.msra.mxu0 %v31
  %1232 = vmatprep.subr.mxu0 %v28
  %1233 = vmatpush1.msra.mxu0 %v27
  %1234 = vmatprep.subr.mxu0 %v24
  %1235 = vmatpush1.msra.mxu0 %v23
  %1236 = vmatprep.subr.mxu0 %v20
  %1237 = vmatpush1.msra.mxu0 %v19
  %1238 = vmatprep.subr.mxu0 0.0
  %1239 = vmatpush2.msra.mxu0 0.0
  %1240 = vmatprep.subr.mxu0 0.0
  %1241 = vmatpush2.msra.mxu0 0.0
  %1242 = vmatprep.subr.mxu0 0.0
  %1243 = vmatpush2.msra.mxu0 0.0
  %1244 = vmatprep.subr.mxu0 0.0
  %1245 = vmatpush2.msra.mxu0 0.0
  %1246 = vmatprep.subr.mxu0 0.0
  %1247 = vmatpush2.msra.mxu0 0.0
  %1248 = vmatprep.subr.mxu0 0.0
  %1249 = vmatpush2.msra.mxu0 0.0
  %1250 = vmatprep.subr.mxu0 0.0
  %1251 = vmatpush2.msra.mxu0 0.0
  %1252 = vmatprep.subr.mxu0 0.0
  %1253 = vmatpush2.msra.mxu0 0.0
  %1254 = vmatprep.subr.mxu0 0.0
  %1255 = vmatpush2.msra.mxu0 0.0
  %1256 = vmatprep.subr.mxu0 0.0
  %1257 = vmatpush2.msra.mxu0 0.0
  %1258 = vmatprep.subr.mxu0 0.0
  %1259 = vmatpush2.msra.mxu0 0.0
  %1260 = vmatprep.subr.mxu0 0.0
  %1261 = vmatpush2.msra.mxu0 0.0
  %1262 = vmatprep.subr.mxu0 0.0
  %1263 = vmatpush2.msra.mxu0 0.0
  %1264 = vmatprep.subr.mxu0 0.0
  %1265 = vmatpush2.msra.mxu0 0.0
  %1266 = vmatprep.subr.mxu0 0.0
  %1267 = vmatpush2.msra.mxu0 0.0
  %1268 = vmatprep.subr.mxu0 0.0
  %1269 = vmatpush2.msra.mxu0 0.0
  %1270 = vmatprep.mubr.f32.mxu0 0.0
  %1271 = vmatmul.mubr.f32.gmra.mxu0 %v1129
  %v1272 = vpop.f32.mrf.mxu0
  %v1273 = vadd.f32 0.0, %v1272
  %v1274 = vpop.f32.mrf.mxu0
  %v1275 = vadd.f32 0.0, %v1274
  %1276 = vdwg.mxu0
  %v1277 = vadd.f32 %v1131, %v1202
  %v1278 = vadd.f32 %v1132, %v1204
  %v1279 = vadd.f32 %v1133, %v1273
  %v1280 = vadd.f32 %v1134, %v1275
  %v1281 = vxor.u32 %v1277, 2147483648
  %v1282 = vmul.f32 %v1281, 1.442695
  %v1283 = vpow.pop %v1282
  %v1284 = vadd.f32 %v1283, 1.0
  %v1285 = vrcp.pop %v1284
  %v1286 = vmul.f32 1.0, %v1285
  %v1287 = vxor.u32 %v1278, 2147483648
  %v1288 = vmul.f32 %v1287, 1.442695
  %v1289 = vpow.pop %v1288
  %v1290 = vadd.f32 %v1289, 1.0
  %v1291 = vrcp.pop %v1290
  %v1292 = vmul.f32 1.0, %v1291
  %v1293 = vtanh.pop %v1279
  %v1294 = vxor.u32 %v1280, 2147483648
  %v1295 = vmul.f32 %v1294, 1.442695
  %v1296 = vpow.pop %v1295
  %v1297 = vadd.f32 %v1296, 1.0
  %v1298 = vrcp.pop %v1297
  %v1299 = vmul.f32 1.0, %v1298
  %v1300 = vmul.f32 %v1292, %v1127
  %v1301 = vmul.f32 %v1286, %v1293
  %v1302 = vadd.f32 %v1300, %v1301
  %v1303 = vtanh.pop %v1302
  %v1304 = vmul.f32 %v1299, %v1303
  %s1305 = scalar_lea.vmem %s0, 224
  %v1306 = vld [vmem:[%s1305] sm:$0xff]
  %v1307 = vld [vmem:[%s1305 + $0x8] sm:$0xff]
  %v1308 = vld [vmem:[%s1305 + $0x10] sm:$0xff]
  %v1309 = vld [vmem:[%s1305 + $0x18] sm:$0xff]
  %1310 = vmatprep.subr.mxu0 %v78
  %1311 = vmatpush1.msra.mxu0 %v77
  %1312 = vmatprep.subr.mxu0 %v74
  %1313 = vmatpush1.msra.mxu0 %v73
  %1314 = vmatprep.subr.mxu0 %v70
  %1315 = vmatpush1.msra.mxu0 %v69
  %1316 = vmatprep.subr.mxu0 %v66
  %1317 = vmatpush1.msra.mxu0 %v65
  %1318 = vmatprep.subr.mxu0 %v62
  %1319 = vmatpush1.msra.mxu0 %v61
  %1320 = vmatprep.subr.mxu0 %v58
  %1321 = vmatpush1.msra.mxu0 %v57
  %1322 = vmatprep.subr.mxu0 %v54
  %1323 = vmatpush1.msra.mxu0 %v53
  %1324 = vmatprep.subr.mxu0 %v50
  %1325 = vmatpush1.msra.mxu0 %v49
  %1326 = vmatprep.subr.mxu0 %v46
  %1327 = vmatpush1.msra.mxu0 %v45
  %1328 = vmatprep.subr.mxu0 %v42
  %1329 = vmatpush1.msra.mxu0 %v41
  %1330 = vmatprep.subr.mxu0 %v38
  %1331 = vmatpush1.msra.mxu0 %v37
  %1332 = vmatprep.subr.mxu0 %v34
  %1333 = vmatpush1.msra.mxu0 %v33
  %1334 = vmatprep.subr.mxu0 %v30
  %1335 = vmatpush1.msra.mxu0 %v29
  %1336 = vmatprep.subr.mxu0 %v26
  %1337 = vmatpush1.msra.mxu0 %v25
  %1338 = vmatprep.subr.mxu0 %v22
  %1339 = vmatpush1.msra.mxu0 %v21
  %1340 = vmatprep.subr.mxu0 %v18
  %1341 = vmatpush1.msra.mxu0 %v17
  %1342 = vmatprep.subr.mxu0 0.0
  %1343 = vmatpush2.msra.mxu0 0.0
  %1344 = vmatprep.subr.mxu0 0.0
  %1345 = vmatpush2.msra.mxu0 0.0
  %1346 = vmatprep.subr.mxu0 0.0
  %1347 = vmatpush2.msra.mxu0 0.0
  %1348 = vmatprep.subr.mxu0 0.0
  %1349 = vmatpush2.msra.mxu0 0.0
  %1350 = vmatprep.subr.mxu0 0.0
  %1351 = vmatpush2.msra.mxu0 0.0
  %1352 = vmatprep.subr.mxu0 0.0
  %1353 = vmatpush2.msra.mxu0 0.0
  %1354 = vmatprep.subr.mxu0 0.0
  %1355 = vmatpush2.msra.mxu0 0.0
  %1356 = vmatprep.subr.mxu0 0.0
  %1357 = vmatpush2.msra.mxu0 0.0
  %1358 = vmatprep.subr.mxu0 0.0
  %1359 = vmatpush2.msra.mxu0 0.0
  %1360 = vmatprep.subr.mxu0 0.0
  %1361 = vmatpush2.msra.mxu0 0.0
  %1362 = vmatprep.subr.mxu0 0.0
  %1363 = vmatpush2.msra.mxu0 0.0
  %1364 = vmatprep.subr.mxu0 0.0
  %1365 = vmatpush2.msra.mxu0 0.0
  %1366 = vmatprep.subr.mxu0 0.0
  %1367 = vmatpush2.msra.mxu0 0.0
  %1368 = vmatprep.subr.mxu0 0.0
  %1369 = vmatpush2.msra.mxu0 0.0
  %1370 = vmatprep.subr.mxu0 0.0
  %1371 = vmatpush2.msra.mxu0 0.0
  %1372 = vmatprep.subr.mxu0 0.0
  %1373 = vmatpush2.msra.mxu0 0.0
  %1374 = vmatprep.mubr.f32.mxu0 0.0
  %1375 = vmatmul.mubr.f32.gmra.mxu0 %v1304
  %v1376 = vpop.f32.mrf.mxu0
  %v1377 = vadd.f32 0.0, %v1376
  %v1378 = vpop.f32.mrf.mxu0
  %v1379 = vadd.f32 0.0, %v1378
  %1380 = vdwg.mxu0
  %1381 = vmatprep.subr.mxu0 %v80
  %1382 = vmatpush1.msra.mxu0 %v79
  %1383 = vmatprep.subr.mxu0 %v76
  %1384 = vmatpush1.msra.mxu0 %v75
  %1385 = vmatprep.subr.mxu0 %v72
  %1386 = vmatpush1.msra.mxu0 %v71
  %1387 = vmatprep.subr.mxu0 %v68
  %1388 = vmatpush1.msra.mxu0 %v67
  %1389 = vmatprep.subr.mxu0 %v64
  %1390 = vmatpush1.msra.mxu0 %v63
  %1391 = vmatprep.subr.mxu0 %v60
  %1392 = vmatpush1.msra.mxu0 %v59
  %1393 = vmatprep.subr.mxu0 %v56
  %1394 = vmatpush1.msra.mxu0 %v55
  %1395 = vmatprep.subr.mxu0 %v52
  %1396 = vmatpush1.msra.mxu0 %v51
  %1397 = vmatprep.subr.mxu0 %v48
  %1398 = vmatpush1.msra.mxu0 %v47
  %1399 = vmatprep.subr.mxu0 %v44
  %1400 = vmatpush1.msra.mxu0 %v43
  %1401 = vmatprep.subr.mxu0 %v40
  %1402 = vmatpush1.msra.mxu0 %v39
  %1403 = vmatprep.subr.mxu0 %v36
  %1404 = vmatpush1.msra.mxu0 %v35
  %1405 = vmatprep.subr.mxu0 %v32
  %1406 = vmatpush1.msra.mxu0 %v31
  %1407 = vmatprep.subr.mxu0 %v28
  %1408 = vmatpush1.msra.mxu0 %v27
  %1409 = vmatprep.subr.mxu0 %v24
  %1410 = vmatpush1.msra.mxu0 %v23
  %1411 = vmatprep.subr.mxu0 %v20
  %1412 = vmatpush1.msra.mxu0 %v19
  %1413 = vmatprep.subr.mxu0 0.0
  %1414 = vmatpush2.msra.mxu0 0.0
  %1415 = vmatprep.subr.mxu0 0.0
  %1416 = vmatpush2.msra.mxu0 0.0
  %1417 = vmatprep.subr.mxu0 0.0
  %1418 = vmatpush2.msra.mxu0 0.0
  %1419 = vmatprep.subr.mxu0 0.0
  %1420 = vmatpush2.msra.mxu0 0.0
  %1421 = vmatprep.subr.mxu0 0.0
  %1422 = vmatpush2.msra.mxu0 0.0
  %1423 = vmatprep.subr.mxu0 0.0
  %1424 = vmatpush2.msra.mxu0 0.0
  %1425 = vmatprep.subr.mxu0 0.0
  %1426 = vmatpush2.msra.mxu0 0.0
  %1427 = vmatprep.subr.mxu0 0.0
  %1428 = vmatpush2.msra.mxu0 0.0
  %1429 = vmatprep.subr.mxu0 0.0
  %1430 = vmatpush2.msra.mxu0 0.0
  %1431 = vmatprep.subr.mxu0 0.0
  %1432 = vmatpush2.msra.mxu0 0.0
  %1433 = vmatprep.subr.mxu0 0.0
  %1434 = vmatpush2.msra.mxu0 0.0
  %1435 = vmatprep.subr.mxu0 0.0
  %1436 = vmatpush2.msra.mxu0 0.0
  %1437 = vmatprep.subr.mxu0 0.0
  %1438 = vmatpush2.msra.mxu0 0.0
  %1439 = vmatprep.subr.mxu0 0.0
  %1440 = vmatpush2.msra.mxu0 0.0
  %1441 = vmatprep.subr.mxu0 0.0
  %1442 = vmatpush2.msra.mxu0 0.0
  %1443 = vmatprep.subr.mxu0 0.0
  %1444 = vmatpush2.msra.mxu0 0.0
  %1445 = vmatprep.mubr.f32.mxu0 0.0
  %1446 = vmatmul.mubr.f32.gmra.mxu0 %v1304
  %v1447 = vpop.f32.mrf.mxu0
  %v1448 = vadd.f32 0.0, %v1447
  %v1449 = vpop.f32.mrf.mxu0
  %v1450 = vadd.f32 0.0, %v1449
  %1451 = vdwg.mxu0
  %v1452 = vadd.f32 %v1306, %v1377
  %v1453 = vadd.f32 %v1307, %v1379
  %v1454 = vadd.f32 %v1308, %v1448
  %v1455 = vadd.f32 %v1309, %v1450
  %v1456 = vxor.u32 %v1452, 2147483648
  %v1457 = vmul.f32 %v1456, 1.442695
  %v1458 = vpow.pop %v1457
  %v1459 = vadd.f32 %v1458, 1.0
  %v1460 = vrcp.pop %v1459
  %v1461 = vmul.f32 1.0, %v1460
  %v1462 = vxor.u32 %v1453, 2147483648
  %v1463 = vmul.f32 %v1462, 1.442695
  %v1464 = vpow.pop %v1463
  %v1465 = vadd.f32 %v1464, 1.0
  %v1466 = vrcp.pop %v1465
  %v1467 = vmul.f32 1.0, %v1466
  %v1468 = vtanh.pop %v1454
  %v1469 = vxor.u32 %v1455, 2147483648
  %v1470 = vmul.f32 %v1469, 1.442695
  %v1471 = vpow.pop %v1470
  %v1472 = vadd.f32 %v1471, 1.0
  %v1473 = vrcp.pop %v1472
  %v1474 = vmul.f32 1.0, %v1473
  %v1475 = vmul.f32 %v1467, %v1302
  %v1476 = vmul.f32 %v1461, %v1468
  %v1477 = vadd.f32 %v1475, %v1476
  %v1478 = vtanh.pop %v1477
  %v1479 = vmul.f32 %v1474, %v1478
  %v1480 = vld [vmem:[%s2] sm:$0xff]
  %v1481 = vld [vmem:[%s2 + $0x8] sm:$0xff]
  %v1482 = vld [vmem:[%s2 + $0x10] sm:$0xff]
  %v1483 = vld [vmem:[%s2 + $0x18] sm:$0xff]
  %v1484 = vld [vmem:[%s2 + $0x20] sm:$0xff]
  %v1485 = vld [vmem:[%s2 + $0x28] sm:$0xff]
  %v1486 = vld [vmem:[%s2 + $0x30] sm:$0xff]
  %v1487 = vld [vmem:[%s2 + $0x38] sm:$0xff]
  %v1488 = vld [vmem:[%s2 + $0x40] sm:$0xff]
  %v1489 = vld [vmem:[%s2 + $0x48] sm:$0xff]
  %v1490 = vld [vmem:[%s2 + $0x50] sm:$0xff]
  %v1491 = vld [vmem:[%s2 + $0x58] sm:$0xff]
  %v1492 = vld [vmem:[%s2 + $0x60] sm:$0xff]
  %v1493 = vld [vmem:[%s2 + $0x68] sm:$0xff]
  %v1494 = vld [vmem:[%s2 + $0x70] sm:$0xff]
  %v1495 = vld [vmem:[%s2 + $0x78] sm:$0xff]
  %v1496 = vld [vmem:[%s3] sm:$0x1]
  %v1498 = vlaneseq
  %v1499 = vshrl.u32 %v1498, 7
  %v1500 = vsub.s32 0, %v1499
  %v1501 = vrot.slane %v1496, %v1500
  %1503 = vmatprep.subr.mxu0 0.0
  %1504 = vmatpush1.msra.mxu0 %v1495
  %1505 = vmatprep.subr.mxu0 0.0
  %1506 = vmatpush1.msra.mxu0 %v1494
  %1507 = vmatprep.subr.mxu0 0.0
  %1508 = vmatpush1.msra.mxu0 %v1493
  %1509 = vmatprep.subr.mxu0 0.0
  %1510 = vmatpush1.msra.mxu0 %v1492
  %1511 = vmatprep.subr.mxu0 0.0
  %1512 = vmatpush1.msra.mxu0 %v1491
  %1513 = vmatprep.subr.mxu0 0.0
  %1514 = vmatpush1.msra.mxu0 %v1490
  %1515 = vmatprep.subr.mxu0 0.0
  %1516 = vmatpush1.msra.mxu0 %v1489
  %1517 = vmatprep.subr.mxu0 0.0
  %1518 = vmatpush1.msra.mxu0 %v1488
  %1519 = vmatprep.subr.mxu0 0.0
  %1520 = vmatpush1.msra.mxu0 %v1487
  %1521 = vmatprep.subr.mxu0 0.0
  %1522 = vmatpush1.msra.mxu0 %v1486
  %1523 = vmatprep.subr.mxu0 0.0
  %1524 = vmatpush1.msra.mxu0 %v1485
  %1525 = vmatprep.subr.mxu0 0.0
  %1526 = vmatpush1.msra.mxu0 %v1484
  %1527 = vmatprep.subr.mxu0 0.0
  %1528 = vmatpush1.msra.mxu0 %v1483
  %1529 = vmatprep.subr.mxu0 0.0
  %1530 = vmatpush1.msra.mxu0 %v1482
  %1531 = vmatprep.subr.mxu0 0.0
  %1532 = vmatpush1.msra.mxu0 %v1481
  %1533 = vmatprep.subr.mxu0 0.0
  %1534 = vmatpush1.msra.mxu0 %v1480
  %1535 = vmatprep.subr.mxu0 0.0
  %1536 = vmatpush2.msra.mxu0 0.0
  %1537 = vmatprep.subr.mxu0 0.0
  %1538 = vmatpush2.msra.mxu0 0.0
  %1539 = vmatprep.subr.mxu0 0.0
  %1540 = vmatpush2.msra.mxu0 0.0
  %1541 = vmatprep.subr.mxu0 0.0
  %1542 = vmatpush2.msra.mxu0 0.0
  %1543 = vmatprep.subr.mxu0 0.0
  %1544 = vmatpush2.msra.mxu0 0.0
  %1545 = vmatprep.subr.mxu0 0.0
  %1546 = vmatpush2.msra.mxu0 0.0
  %1547 = vmatprep.subr.mxu0 0.0
  %1548 = vmatpush2.msra.mxu0 0.0
  %1549 = vmatprep.subr.mxu0 0.0
  %1550 = vmatpush2.msra.mxu0 0.0
  %1551 = vmatprep.subr.mxu0 0.0
  %1552 = vmatpush2.msra.mxu0 0.0
  %1553 = vmatprep.subr.mxu0 0.0
  %1554 = vmatpush2.msra.mxu0 0.0
  %1555 = vmatprep.subr.mxu0 0.0
  %1556 = vmatpush2.msra.mxu0 0.0
  %1557 = vmatprep.subr.mxu0 0.0
  %1558 = vmatpush2.msra.mxu0 0.0
  %1559 = vmatprep.subr.mxu0 0.0
  %1560 = vmatpush2.msra.mxu0 0.0
  %1561 = vmatprep.subr.mxu0 0.0
  %1562 = vmatpush2.msra.mxu0 0.0
  %1563 = vmatprep.subr.mxu0 0.0
  %1564 = vmatpush2.msra.mxu0 0.0
  %1565 = vmatprep.subr.mxu0 0.0
  %1566 = vmatpush2.msra.mxu0 0.0
  %1567 = vmatprep.mubr.f32.mxu0 0.0
  %1568 = vmatmul.mubr.f32.gmra.mxu0 %v1479
  %v1569 = vpop.f32.mrf.mxu0
  %v1570 = vadd.f32 %v1501, %v1569
  %v1571 = vpop.f32.mrf.mxu0
  %1572 = vdwg.mxu0
  %1573 = vst [vmem:[%s4] sm:$0xff] %v1570
  // Predicated region
  $region18: #{lstm_classifier_forward.1} parent=0 // pred_check
    _
  $region19: #{lstm_classifier_forward.1} parent=0 // pred_check_branch
    %1575 = sbr.rel (0) target = $region21
  $region20: #{lstm_classifier_forward.1} parent=0 // pred_region
    _
  $region21: #{lstm_classifier_forward.1} parent=0 // pred_fallthru
    _
  // Predicated region
  $region22: #{lstm_classifier_forward.1} parent=0 // pred_check
    _
  $region23: #{lstm_classifier_forward.1} parent=0 // pred_check_branch
    %1577 = sbr.rel (0) target = $region25
  $region24: #{lstm_classifier_forward.1} parent=0 // pred_region
    _
  $region25: #{lstm_classifier_forward.1} parent=0 // pred_fallthru
    _

</llo_original>
